<compile_context>
chip_gen: v6e
topology: v6e:2x2x1
jax: 0.10.0
libtpu: 0.0.40
codegen_flags: <defaults>
</compile_context>

<pallas_src>
import functools
import math

import jax
import jax.numpy as jnp
from jax.experimental import pallas as pl
from jax.experimental.pallas import tpu as pltpu


# ----------------------------------------------------------------------------
# Diffusion schedule (pure setup, plain JAX)
# ----------------------------------------------------------------------------
def beta_scheduling(timesteps: int) -> jnp.ndarray:
    scale = 1000.0 / timesteps
    beta_start = scale * 0.0001
    beta_end = scale * 0.02
    return jnp.linspace(beta_start, beta_end, timesteps, dtype=jnp.float32)


# ----------------------------------------------------------------------------
# Banded block-Toeplitz conv weights (host-side, one-time per spatial width W)
#   conv 'same' 3x3:  out[h, w, co] = sum_{kh,kw,ci} x[h+kh-1, w+kw-1, ci] *
#                                     w[kh, kw, ci, co]
#   With activations flattened to (H, W*Ci) the kw/ci contraction for a fixed
#   kh is a single matmul against  sum_kw kron(eye(W, k=1-kw), w[kh, kw]).
# ----------------------------------------------------------------------------
def _banded_conv_weight(w, W):
    # w: (3, 3, Ci, Co)  ->  (3, W*Ci, W*Co)
    rows = []
    for kh in range(3):
        m = None
        for kw in range(3):
            shift = jnp.eye(W, k=1 - kw, dtype=jnp.float32)
            blk = jnp.kron(shift, w[kh, kw])
            m = blk if m is None else m + blk
        rows.append(m)
    return jnp.stack(rows, axis=0)


# ----------------------------------------------------------------------------
# Fused Pallas kernel: q-sample + time-MLP + conv1 + FiLM/ReLU + conv2
# ----------------------------------------------------------------------------
def _fused_diffusion_kernel(
    t_ref, sa_tab_ref, som_tab_ref,                   # SMEM: (B,), (T,), (T,)
    lab_ref, noise_ref,                               # VMEM blocks (H, W*cin)
    wt_ref, bt_ref, w1_ref, b1_ref, w2_ref, b2_ref,   # VMEM weights (resident)
    out_ref,                                          # VMEM block (H, W*cout)
    xpad1_ref, xpad2_ref,                             # VMEM scratch (padded rows)
    *, H, W, cin, chans, cout, half):
    b = pl.program_id(0)
    t_i = t_ref[b]                       # int32 timestep for this batch element
    sa = sa_tab_ref[t_i]                 # sqrt(a_cumprod[t])       (SMEM gather)
    som = som_tab_ref[t_i]               # sqrt(1 - a_cumprod[t])

    # ---- q-sample noising (fused, no x_t round-trip to HBM) -----------------
    x_t = sa * lab_ref[...] + som * noise_ref[...]                  # (H, W*cin)

    # ---- sinusoidal time embedding + time MLP (EUP exp/sin/cos + MXU) -------
    idx = jax.lax.broadcasted_iota(jnp.int32, (1, half), 1).astype(jnp.float32)
    freqs = jnp.exp(idx * (-math.log(10000.0) / half))              # (1, half)
    args = t_i.astype(jnp.float32) * freqs
    emb = jnp.concatenate([jnp.sin(args), jnp.cos(args)], axis=1)   # (1, 2*half)
    # wt/bt are pre-tiled W times along lanes -> t_proj is already lane-aligned
    # with the (H, W*chans) conv1 output (no in-kernel channel tiling needed).
    t_proj = jnp.maximum(
        jnp.dot(emb, wt_ref[...], preferred_element_type=jnp.float32)
        + bt_ref[...], 0.0)                                         # (1, W*chans)

    # ---- conv1: 3x3 'same', cin -> chans, as 3 row-shifted matmuls ----------
    zrow1 = jnp.zeros((1, W * cin), jnp.float32)
    xpad1_ref[0:1, :] = zrow1
    xpad1_ref[H + 1:H + 2, :] = zrow1
    xpad1_ref[1:1 + H, :] = x_t
    acc1 = jnp.zeros((H, W * chans), jnp.float32)
    for kh in range(3):                              # static 3-tap unroll
        acc1 = acc1 + jnp.dot(xpad1_ref[kh:kh + H, :], w1_ref[kh],
                              preferred_element_type=jnp.float32)
    h = jnp.maximum(acc1 + b1_ref[...] + t_proj, 0.0)               # (H, W*chans)

    # ---- conv2: 3x3 'same', chans -> cout -----------------------------------
    zrow2 = jnp.zeros((1, W * chans), jnp.float32)
    xpad2_ref[0:1, :] = zrow2
    xpad2_ref[H + 1:H + 2, :] = zrow2
    xpad2_ref[1:1 + H, :] = h
    acc2 = jnp.zeros((H, W * cout), jnp.float32)
    for kh in range(3):
        acc2 = acc2 + jnp.dot(xpad2_ref[kh:kh + H, :], w2_ref[kh],
                              preferred_element_type=jnp.float32)
    out_ref[...] = acc2 + b2_ref[...]                               # (H, W*cout)


def _build_fused_call(B, H, W, cin, chans, cout, half):
    kernel = functools.partial(_fused_diffusion_kernel, H=H, W=W, cin=cin,
                               chans=chans, cout=cout, half=half)
    smem_spec = pl.BlockSpec(memory_space=pltpu.MemorySpace.SMEM)
    return pl.pallas_call(
        kernel,
        out_shape=jax.ShapeDtypeStruct((B, H, W * cout), jnp.float32),
        grid=(B,),
        in_specs=[
            smem_spec,                                                # t
            smem_spec,                                                # sqrt(a_cum)
            smem_spec,                                                # sqrt(1-a_cum)
            pl.BlockSpec((None, H, W * cin), lambda b: (b, 0, 0)),    # lab
            pl.BlockSpec((None, H, W * cin), lambda b: (b, 0, 0)),    # noise
            pl.BlockSpec((2 * half, W * chans), lambda b: (0, 0)),    # wt (tiled)
            pl.BlockSpec((1, W * chans), lambda b: (0, 0)),           # bt (tiled)
            pl.BlockSpec((3, W * cin, W * chans), lambda b: (0, 0, 0)),   # w1 band
            pl.BlockSpec((1, W * chans), lambda b: (0, 0)),           # b1 (tiled)
            pl.BlockSpec((3, W * chans, W * cout), lambda b: (0, 0, 0)),  # w2 band
            pl.BlockSpec((1, W * cout), lambda b: (0, 0)),            # b2 (tiled)
        ],
        out_specs=pl.BlockSpec((None, H, W * cout), lambda b: (b, 0, 0)),
        scratch_shapes=[
            pltpu.VMEM((H + 2, W * cin), jnp.float32),    # padded conv1 input
            pltpu.VMEM((H + 2, W * chans), jnp.float32),  # padded conv2 input
        ],
        compiler_params=pltpu.CompilerParams(
            dimension_semantics=("parallel",)),           # batch -> 2 TCs on v7x
    )


# ----------------------------------------------------------------------------
# Diffusion module
# ----------------------------------------------------------------------------
class Diffusion:
    def __init__(self, in_chans=4, out_chans=4, chans=8, time_emb_dim=256, seed=0):
        self.timesteps = 1000
        self.in_chans = in_chans
        self.out_chans = out_chans
        self.chans = chans
        self.half = time_emb_dim // 2

        betas = beta_scheduling(self.timesteps)
        alphas = 1.0 - betas
        a_cumprod = jnp.cumprod(alphas, axis=0)
        self.sqrt_a_cumprod = jnp.sqrt(a_cumprod)
        self.sqrt_one_minus_a_cumprod = jnp.sqrt(1.0 - a_cumprod)

        # deterministic synthetic weights (surrogate Unet)
        k = jax.random.split(jax.random.PRNGKey(seed), 3)
        self.wt = 0.02 * jax.random.normal(k[0], (time_emb_dim, chans), jnp.float32)
        self.bt = jnp.zeros((chans,), jnp.float32)
        self.w1 = 0.1 * jax.random.normal(k[1], (3, 3, in_chans, chans), jnp.float32)
        self.b1 = jnp.zeros((chans,), jnp.float32)
        self.w2 = 0.1 * jax.random.normal(k[2], (3, 3, chans, out_chans), jnp.float32)
        self.b2 = jnp.zeros((out_chans,), jnp.float32)
        self._derived_cache = {}

    def _derived(self, W):
        """Lane-layout weight prep (one-time per spatial width W)."""
        if W in self._derived_cache:
            return self._derived_cache[W]
        d = {
            "wt_tiled": jnp.tile(self.wt, (1, W)),                          # (256, W*chans)
            "bt_tiled": jnp.tile(self.bt, (W,)).reshape(1, W * self.chans),
            "b1_tiled": jnp.tile(self.b1, (W,)).reshape(1, W * self.chans),
            "b2_tiled": jnp.tile(self.b2, (W,)).reshape(1, W * self.out_chans),
            "w1_band": _banded_conv_weight(self.w1, W),                     # (3, W*cin, W*chans)
            "w2_band": _banded_conv_weight(self.w2, W),                     # (3, W*chans, W*cout)
        }
        self._derived_cache[W] = d
        return d

    def forward(self, lab, rng):
        assert lab.ndim == 4, "Tensors must be 4D"
        B, C, H, W = lab.shape
        assert C == self.in_chans
        k_t, k_n = jax.random.split(rng)

        t = jax.random.randint(k_t, (B,), 0, self.timesteps, dtype=jnp.int32)
        noise = jax.random.normal(k_n, lab.shape, dtype=jnp.float32)
        target = noise

        # one-time boundary layout change: NCHW -> lane-dense (B, H, W*C)
        lab_l = jnp.transpose(lab.astype(jnp.float32), (0, 2, 3, 1)).reshape(B, H, W * C)
        noise_l = jnp.transpose(noise, (0, 2, 3, 1)).reshape(B, H, W * C)

        d = self._derived(W)
        fused = _build_fused_call(B, H, W, C, self.chans, self.out_chans, self.half)
        out_l = fused(t, self.sqrt_a_cumprod, self.sqrt_one_minus_a_cumprod,
                      lab_l, noise_l,
                      d["wt_tiled"], d["bt_tiled"],
                      d["w1_band"], d["b1_tiled"],
                      d["w2_band"], d["b2_tiled"])

        output = out_l.reshape(B, H, W, self.out_chans).transpose(0, 3, 1, 2)
        return output, target


# ----------------------------------------------------------------------------
# Pure-JAX reference of the same surrogate network (for a correctness check)
# ----------------------------------------------------------------------------
def _reference_forward(model, lab, noise, t):
    B, C, H, W = lab.shape
    hi = jax.lax.Precision.HIGHEST
    sa = model.sqrt_a_cumprod[t].reshape(B, 1, 1, 1)
    som = model.sqrt_one_minus_a_cumprod[t].reshape(B, 1, 1, 1)
    x = jnp.transpose(sa * lab + som * noise, (0, 2, 3, 1))          # NHWC

    half = model.half
    freqs = jnp.exp(jnp.arange(half, dtype=jnp.float32) * (-math.log(10000.0) / half))
    args = t.astype(jnp.float32)[:, None] * freqs[None, :]
    emb = jnp.concatenate([jnp.sin(args), jnp.cos(args)], axis=-1)
    t_proj = jnp.maximum(jnp.dot(emb, model.wt, precision=hi) + model.bt, 0.0)

    h = jax.lax.conv_general_dilated(
        x, model.w1, (1, 1), "SAME",
        dimension_numbers=("NHWC", "HWIO", "NHWC"), precision=hi) + model.b1
    h = jnp.maximum(h + t_proj[:, None, None, :], 0.0)
    o = jax.lax.conv_general_dilated(
        h, model.w2, (1, 1), "SAME",
        dimension_numbers=("NHWC", "HWIO", "NHWC"), precision=hi) + model.b2
    return jnp.transpose(o, (0, 3, 1, 2))                            # NCHW


# ----------------------------------------------------------------------------
if __name__ == "__main__":
    B, C, H, W = 2, 4, 16, 16
    key = jax.random.PRNGKey(0)
    k_lab, k_fwd = jax.random.split(key)

    lab = jax.random.normal(k_lab, (B, C, H, W), dtype=jnp.float32)

    model = Diffusion(in_chans=C, out_chans=C, chans=8, time_emb_dim=256, seed=0)
    output, target = model.forward(lab, k_fwd)
    jax.block_until_ready(output)
    jax.block_until_ready(target)

    assert output.shape == (B, C, H, W) and target.shape == (B, C, H, W)
    assert output.dtype == jnp.float32 and target.dtype == jnp.float32

    # correctness self-check against a pure-JAX reference (same t / noise)
    k_t, _ = jax.random.split(k_fwd)
    t_check = jax.random.randint(k_t, (B,), 0, model.timesteps, dtype=jnp.int32)
    ref = _reference_forward(model, lab, target, t_check)
    err = float(jnp.max(jnp.abs(output - ref)))
    assert err < 2e-2, f"kernel/reference mismatch: max abs err = {err}"

    print("KERNEL_OK")
</pallas_src>

<mosaic_0001>
module attributes {stable_mosaic.version = 11 : i64} {
  func.func @_fused_diffusion_kernel(%arg0: i32, %arg1: memref<2xi32, #tpu.memory_space<smem>>, %arg2: memref<1000xf32, #tpu.memory_space<smem>>, %arg3: memref<1000xf32, #tpu.memory_space<smem>>, %arg4: memref<1x16x64xf32, #tpu.memory_space<vmem>>, %arg5: memref<1x16x64xf32, #tpu.memory_space<vmem>>, %arg6: memref<256x128xf32, #tpu.memory_space<vmem>>, %arg7: memref<1x128xf32, #tpu.memory_space<vmem>>, %arg8: memref<3x64x128xf32, #tpu.memory_space<vmem>>, %arg9: memref<1x128xf32, #tpu.memory_space<vmem>>, %arg10: memref<3x128x64xf32, #tpu.memory_space<vmem>>, %arg11: memref<1x64xf32, #tpu.memory_space<vmem>>, %arg12: memref<1x16x64xf32, #tpu.memory_space<vmem>>, %arg13: memref<18x64xf32, #tpu.memory_space<vmem>>, %arg14: memref<18x128xf32, #tpu.memory_space<vmem>>) attributes {dimension_semantics = [#tpu.dimension_semantics<parallel>], iteration_bounds = array<i64: 2>, scalar_prefetch = 0 : i64, scratch_operands = 2 : i64, tpu.core_type = #tpu.core_type<tc>, window_params = [{transform_indices = @transform_0, window_bounds = array<i64: 2>}, {transform_indices = @transform_1, window_bounds = array<i64: 1000>}, {transform_indices = @transform_2, window_bounds = array<i64: 1000>}, {transform_indices = @transform_3, window_bounds = array<i64: 1, 16, 64>}, {transform_indices = @transform_4, window_bounds = array<i64: 1, 16, 64>}, {pipeline_mode = #tpu.pipeline_mode<synchronous>, transform_indices = @transform_5, window_bounds = array<i64: 256, 128>}, {pipeline_mode = #tpu.pipeline_mode<synchronous>, transform_indices = @transform_6, window_bounds = array<i64: 1, 128>}, {pipeline_mode = #tpu.pipeline_mode<synchronous>, transform_indices = @transform_7, window_bounds = array<i64: 3, 64, 128>}, {pipeline_mode = #tpu.pipeline_mode<synchronous>, transform_indices = @transform_8, window_bounds = array<i64: 1, 128>}, {pipeline_mode = #tpu.pipeline_mode<synchronous>, transform_indices = @transform_9, window_bounds = array<i64: 3, 128, 64>}, {pipeline_mode = #tpu.pipeline_mode<synchronous>, transform_indices = @transform_10, window_bounds = array<i64: 1, 64>}, {transform_indices = @transform_11, window_bounds = array<i64: 1, 16, 64>}]} {
    %0 = arith.index_cast %arg0 : i32 to index
    %1 = memref.load %arg1[%0] : memref<2xi32, #tpu.memory_space<smem>>
    %2 = arith.index_cast %1 : i32 to index
    %3 = memref.load %arg2[%2] : memref<1000xf32, #tpu.memory_space<smem>>
    %4 = arith.index_cast %1 : i32 to index
    %5 = memref.load %arg3[%4] : memref<1000xf32, #tpu.memory_space<smem>>
    %c0 = arith.constant 0 : index
    %c0_0 = arith.constant 0 : index
    %c0_1 = arith.constant 0 : index
    %6 = vector.load %arg4[%c0, %c0_0, %c0_1] : memref<1x16x64xf32, #tpu.memory_space<vmem>>, vector<1x16x64xf32>
    %7 = vector.shape_cast %6 : vector<1x16x64xf32> to vector<16x64xf32>
    %8 = vector.broadcast %3 : f32 to vector<16x64xf32>
    %9 = arith.mulf %8, %7 : vector<16x64xf32>
    %c0_2 = arith.constant 0 : index
    %c0_3 = arith.constant 0 : index
    %c0_4 = arith.constant 0 : index
    %10 = vector.load %arg5[%c0_2, %c0_3, %c0_4] : memref<1x16x64xf32, #tpu.memory_space<vmem>>, vector<1x16x64xf32>
    %11 = vector.shape_cast %10 : vector<1x16x64xf32> to vector<16x64xf32>
    %12 = vector.broadcast %5 : f32 to vector<16x64xf32>
    %13 = arith.mulf %12, %11 : vector<16x64xf32>
    %14 = arith.addf %9, %13 : vector<16x64xf32>
    %15 = tpu.iota {dimensions = array<i32: 1>} : vector<1x128xi32>
    %16 = arith.sitofp %15 : vector<1x128xi32> to vector<1x128xf32>
    %cst = arith.constant -0.0719557852 : f32
    %17 = vector.broadcast %cst : f32 to vector<1x128xf32>
    %18 = arith.mulf %16, %17 : vector<1x128xf32>
    %19 = math.exp %18 : vector<1x128xf32>
    %20 = arith.sitofp %1 : i32 to f32
    %21 = vector.broadcast %20 : f32 to vector<1x128xf32>
    %22 = arith.mulf %21, %19 : vector<1x128xf32>
    %23 = math.sin %22 : vector<1x128xf32>
    %24 = math.cos %22 : vector<1x128xf32>
    %25 = tpu.concatenate %23, %24 in 1 : vector<1x128xf32>, vector<1x128xf32> -> vector<1x256xf32>
    %c0_5 = arith.constant 0 : index
    %c0_6 = arith.constant 0 : index
    %26 = vector.load %arg6[%c0_5, %c0_6] : memref<256x128xf32, #tpu.memory_space<vmem>>, vector<256x128xf32>
    %cst_7 = arith.constant dense<0.000000e+00> : vector<1x128xf32>
    %27 = tpu.matmul %25, %26, %cst_7 {dimension_numbers = #tpu.dot_dimension_numbers<[1], [0], [0], [1], [0, 0, 1, 1], [], []>} : vector<1x256xf32>, vector<256x128xf32>, vector<1x128xf32> -> vector<1x128xf32>
    %c0_8 = arith.constant 0 : index
    %c0_9 = arith.constant 0 : index
    %28 = vector.load %arg7[%c0_8, %c0_9] : memref<1x128xf32, #tpu.memory_space<vmem>>, vector<1x128xf32>
    %29 = arith.addf %27, %28 : vector<1x128xf32>
    %cst_10 = arith.constant 0.000000e+00 : f32
    %30 = vector.broadcast %cst_10 : f32 to vector<1x128xf32>
    %31 = arith.maximumf %29, %30 : vector<1x128xf32>
    %cst_11 = arith.constant 0.000000e+00 : f32
    %32 = vector.broadcast %cst_11 : f32 to vector<1x64xf32>
    %c0_12 = arith.constant 0 : index
    %c0_13 = arith.constant 0 : index
    %33 = vector.load %arg13[%c0_12, %c0_13] : memref<18x64xf32, #tpu.memory_space<vmem>>, vector<1x64xf32>
    tpu.vector_store %arg13[%c0_12, %c0_13], %32 {strides = array<i32>} : memref<18x64xf32, #tpu.memory_space<vmem>>, vector<1x64xf32>,
    %c17 = arith.constant 17 : index
    %c0_14 = arith.constant 0 : index
    %34 = vector.load %arg13[%c17, %c0_14] : memref<18x64xf32, #tpu.memory_space<vmem>>, vector<1x64xf32>
    tpu.vector_store %arg13[%c17, %c0_14], %32 {strides = array<i32>} : memref<18x64xf32, #tpu.memory_space<vmem>>, vector<1x64xf32>,
    %c1 = arith.constant 1 : index
    %c0_15 = arith.constant 0 : index
    %35 = vector.load %arg13[%c1, %c0_15] : memref<18x64xf32, #tpu.memory_space<vmem>>, vector<16x64xf32>
    tpu.vector_store %arg13[%c1, %c0_15], %14 {strides = array<i32>} : memref<18x64xf32, #tpu.memory_space<vmem>>, vector<16x64xf32>,
    %cst_16 = arith.constant 0.000000e+00 : f32
    %36 = vector.broadcast %cst_16 : f32 to vector<16x128xf32>
    %c0_17 = arith.constant 0 : index
    %c0_18 = arith.constant 0 : index
    %37 = vector.load %arg13[%c0_17, %c0_18] : memref<18x64xf32, #tpu.memory_space<vmem>>, vector<16x64xf32>
    %c0_19 = arith.constant 0 : index
    %c0_20 = arith.constant 0 : index
    %c0_21 = arith.constant 0 : index
    %38 = vector.load %arg8[%c0_19, %c0_20, %c0_21] : memref<3x64x128xf32, #tpu.memory_space<vmem>>, vector<1x64x128xf32>
    %39 = vector.shape_cast %38 : vector<1x64x128xf32> to vector<64x128xf32>
    %cst_22 = arith.constant dense<0.000000e+00> : vector<16x128xf32>
    %40 = tpu.matmul %37, %39, %cst_22 {dimension_numbers = #tpu.dot_dimension_numbers<[1], [0], [0], [1], [0, 0, 1, 1], [], []>} : vector<16x64xf32>, vector<64x128xf32>, vector<16x128xf32> -> vector<16x128xf32>
    %41 = arith.addf %36, %40 : vector<16x128xf32>
    %c1_23 = arith.constant 1 : index
    %c0_24 = arith.constant 0 : index
    %42 = vector.load %arg13[%c1_23, %c0_24] : memref<18x64xf32, #tpu.memory_space<vmem>>, vector<16x64xf32>
    %c1_25 = arith.constant 1 : index
    %c0_26 = arith.constant 0 : index
    %c0_27 = arith.constant 0 : index
    %43 = vector.load %arg8[%c1_25, %c0_26, %c0_27] : memref<3x64x128xf32, #tpu.memory_space<vmem>>, vector<1x64x128xf32>
    %44 = vector.shape_cast %43 : vector<1x64x128xf32> to vector<64x128xf32>
    %cst_28 = arith.constant dense<0.000000e+00> : vector<16x128xf32>
    %45 = tpu.matmul %42, %44, %cst_28 {dimension_numbers = #tpu.dot_dimension_numbers<[1], [0], [0], [1], [0, 0, 1, 1], [], []>} : vector<16x64xf32>, vector<64x128xf32>, vector<16x128xf32> -> vector<16x128xf32>
    %46 = arith.addf %41, %45 : vector<16x128xf32>
    %c2 = arith.constant 2 : index
    %c0_29 = arith.constant 0 : index
    %47 = vector.load %arg13[%c2, %c0_29] : memref<18x64xf32, #tpu.memory_space<vmem>>, vector<16x64xf32>
    %c2_30 = arith.constant 2 : index
    %c0_31 = arith.constant 0 : index
    %c0_32 = arith.constant 0 : index
    %48 = vector.load %arg8[%c2_30, %c0_31, %c0_32] : memref<3x64x128xf32, #tpu.memory_space<vmem>>, vector<1x64x128xf32>
    %49 = vector.shape_cast %48 : vector<1x64x128xf32> to vector<64x128xf32>
    %cst_33 = arith.constant dense<0.000000e+00> : vector<16x128xf32>
    %50 = tpu.matmul %47, %49, %cst_33 {dimension_numbers = #tpu.dot_dimension_numbers<[1], [0], [0], [1], [0, 0, 1, 1], [], []>} : vector<16x64xf32>, vector<64x128xf32>, vector<16x128xf32> -> vector<16x128xf32>
    %51 = arith.addf %46, %50 : vector<16x128xf32>
    %c0_34 = arith.constant 0 : index
    %c0_35 = arith.constant 0 : index
    %52 = vector.load %arg9[%c0_34, %c0_35] : memref<1x128xf32, #tpu.memory_space<vmem>>, vector<1x128xf32>
    %53 = vector.broadcast %52 : vector<1x128xf32> to vector<16x128xf32>
    %54 = arith.addf %51, %53 : vector<16x128xf32>
    %55 = vector.broadcast %31 : vector<1x128xf32> to vector<16x128xf32>
    %56 = arith.addf %54, %55 : vector<16x128xf32>
    %cst_36 = arith.constant 0.000000e+00 : f32
    %57 = vector.broadcast %cst_36 : f32 to vector<16x128xf32>
    %58 = arith.maximumf %56, %57 : vector<16x128xf32>
    %cst_37 = arith.constant 0.000000e+00 : f32
    %59 = vector.broadcast %cst_37 : f32 to vector<1x128xf32>
    %c0_38 = arith.constant 0 : index
    %c0_39 = arith.constant 0 : index
    %60 = vector.load %arg14[%c0_38, %c0_39] : memref<18x128xf32, #tpu.memory_space<vmem>>, vector<1x128xf32>
    tpu.vector_store %arg14[%c0_38, %c0_39], %59 {strides = array<i32>} : memref<18x128xf32, #tpu.memory_space<vmem>>, vector<1x128xf32>,
    %c17_40 = arith.constant 17 : index
    %c0_41 = arith.constant 0 : index
    %61 = vector.load %arg14[%c17_40, %c0_41] : memref<18x128xf32, #tpu.memory_space<vmem>>, vector<1x128xf32>
    tpu.vector_store %arg14[%c17_40, %c0_41], %59 {strides = array<i32>} : memref<18x128xf32, #tpu.memory_space<vmem>>, vector<1x128xf32>,
    %c1_42 = arith.constant 1 : index
    %c0_43 = arith.constant 0 : index
    %62 = vector.load %arg14[%c1_42, %c0_43] : memref<18x128xf32, #tpu.memory_space<vmem>>, vector<16x128xf32>
    tpu.vector_store %arg14[%c1_42, %c0_43], %58 {strides = array<i32>} : memref<18x128xf32, #tpu.memory_space<vmem>>, vector<16x128xf32>,
    %cst_44 = arith.constant 0.000000e+00 : f32
    %63 = vector.broadcast %cst_44 : f32 to vector<16x64xf32>
    %c0_45 = arith.constant 0 : index
    %c0_46 = arith.constant 0 : index
    %64 = vector.load %arg14[%c0_45, %c0_46] : memref<18x128xf32, #tpu.memory_space<vmem>>, vector<16x128xf32>
    %c0_47 = arith.constant 0 : index
    %c0_48 = arith.constant 0 : index
    %c0_49 = arith.constant 0 : index
    %65 = vector.load %arg10[%c0_47, %c0_48, %c0_49] : memref<3x128x64xf32, #tpu.memory_space<vmem>>, vector<1x128x64xf32>
    %66 = vector.shape_cast %65 : vector<1x128x64xf32> to vector<128x64xf32>
    %cst_50 = arith.constant dense<0.000000e+00> : vector<16x64xf32>
    %67 = tpu.matmul %64, %66, %cst_50 {dimension_numbers = #tpu.dot_dimension_numbers<[1], [0], [0], [1], [0, 0, 1, 1], [], []>} : vector<16x128xf32>, vector<128x64xf32>, vector<16x64xf32> -> vector<16x64xf32>
    %68 = arith.addf %63, %67 : vector<16x64xf32>
    %c1_51 = arith.constant 1 : index
    %c0_52 = arith.constant 0 : index
    %69 = vector.load %arg14[%c1_51, %c0_52] : memref<18x128xf32, #tpu.memory_space<vmem>>, vector<16x128xf32>
    %c1_53 = arith.constant 1 : index
    %c0_54 = arith.constant 0 : index
    %c0_55 = arith.constant 0 : index
    %70 = vector.load %arg10[%c1_53, %c0_54, %c0_55] : memref<3x128x64xf32, #tpu.memory_space<vmem>>, vector<1x128x64xf32>
    %71 = vector.shape_cast %70 : vector<1x128x64xf32> to vector<128x64xf32>
    %cst_56 = arith.constant dense<0.000000e+00> : vector<16x64xf32>
    %72 = tpu.matmul %69, %71, %cst_56 {dimension_numbers = #tpu.dot_dimension_numbers<[1], [0], [0], [1], [0, 0, 1, 1], [], []>} : vector<16x128xf32>, vector<128x64xf32>, vector<16x64xf32> -> vector<16x64xf32>
    %73 = arith.addf %68, %72 : vector<16x64xf32>
    %c2_57 = arith.constant 2 : index
    %c0_58 = arith.constant 0 : index
    %74 = vector.load %arg14[%c2_57, %c0_58] : memref<18x128xf32, #tpu.memory_space<vmem>>, vector<16x128xf32>
    %c2_59 = arith.constant 2 : index
    %c0_60 = arith.constant 0 : index
    %c0_61 = arith.constant 0 : index
    %75 = vector.load %arg10[%c2_59, %c0_60, %c0_61] : memref<3x128x64xf32, #tpu.memory_space<vmem>>, vector<1x128x64xf32>
    %76 = vector.shape_cast %75 : vector<1x128x64xf32> to vector<128x64xf32>
    %cst_62 = arith.constant dense<0.000000e+00> : vector<16x64xf32>
    %77 = tpu.matmul %74, %76, %cst_62 {dimension_numbers = #tpu.dot_dimension_numbers<[1], [0], [0], [1], [0, 0, 1, 1], [], []>} : vector<16x128xf32>, vector<128x64xf32>, vector<16x64xf32> -> vector<16x64xf32>
    %78 = arith.addf %73, %77 : vector<16x64xf32>
    %c0_63 = arith.constant 0 : index
    %c0_64 = arith.constant 0 : index
    %79 = vector.load %arg11[%c0_63, %c0_64] : memref<1x64xf32, #tpu.memory_space<vmem>>, vector<1x64xf32>
    %80 = vector.broadcast %79 : vector<1x64xf32> to vector<16x64xf32>
    %81 = arith.addf %78, %80 : vector<16x64xf32>
    %c0_65 = arith.constant 0 : index
    %c0_66 = arith.constant 0 : index
    %c0_67 = arith.constant 0 : index
    %82 = vector.load %arg12[%c0_65, %c0_66, %c0_67] : memref<1x16x64xf32, #tpu.memory_space<vmem>>, vector<1x16x64xf32>
    %83 = vector.shape_cast %82 : vector<1x16x64xf32> to vector<16x64xf32>
    %84 = vector.shape_cast %81 : vector<16x64xf32> to vector<1x16x64xf32>
    tpu.vector_store %arg12[%c0_65, %c0_66, %c0_67], %84 {strides = array<i32>} : memref<1x16x64xf32, #tpu.memory_space<vmem>>, vector<1x16x64xf32>,
    return
  }
  func.func @transform_0(%arg0: i32) -> i32 {
    %c0_i32 = arith.constant 0 : i32
    %c0_i32_0 = arith.constant 0 : i32
    return %c0_i32 : i32
  }
  func.func @transform_1(%arg0: i32) -> i32 {
    %c0_i32 = arith.constant 0 : i32
    %c0_i32_0 = arith.constant 0 : i32
    return %c0_i32 : i32
  }
  func.func @transform_2(%arg0: i32) -> i32 {
    %c0_i32 = arith.constant 0 : i32
    %c0_i32_0 = arith.constant 0 : i32
    return %c0_i32 : i32
  }
  func.func @transform_3(%arg0: i32) -> (i32, i32, i32) {
    %c0_i32 = arith.constant 0 : i32
    %c0_i32_0 = arith.constant 0 : i32
    %c0_i32_1 = arith.constant 0 : i32
    return %arg0, %c0_i32, %c0_i32_0 : i32, i32, i32
  }
  func.func @transform_4(%arg0: i32) -> (i32, i32, i32) {
    %c0_i32 = arith.constant 0 : i32
    %c0_i32_0 = arith.constant 0 : i32
    %c0_i32_1 = arith.constant 0 : i32
    return %arg0, %c0_i32, %c0_i32_0 : i32, i32, i32
  }
  func.func @transform_5(%arg0: i32) -> (i32, i32) {
    %c0_i32 = arith.constant 0 : i32
    %c0_i32_0 = arith.constant 0 : i32
    %c0_i32_1 = arith.constant 0 : i32
    return %c0_i32, %c0_i32_0 : i32, i32
  }
  func.func @transform_6(%arg0: i32) -> (i32, i32) {
    %c0_i32 = arith.constant 0 : i32
    %c0_i32_0 = arith.constant 0 : i32
    %c0_i32_1 = arith.constant 0 : i32
    return %c0_i32, %c0_i32_0 : i32, i32
  }
  func.func @transform_7(%arg0: i32) -> (i32, i32, i32) {
    %c0_i32 = arith.constant 0 : i32
    %c0_i32_0 = arith.constant 0 : i32
    %c0_i32_1 = arith.constant 0 : i32
    %c0_i32_2 = arith.constant 0 : i32
    return %c0_i32, %c0_i32_0, %c0_i32_1 : i32, i32, i32
  }
  func.func @transform_8(%arg0: i32) -> (i32, i32) {
    %c0_i32 = arith.constant 0 : i32
    %c0_i32_0 = arith.constant 0 : i32
    %c0_i32_1 = arith.constant 0 : i32
    return %c0_i32, %c0_i32_0 : i32, i32
  }
  func.func @transform_9(%arg0: i32) -> (i32, i32, i32) {
    %c0_i32 = arith.constant 0 : i32
    %c0_i32_0 = arith.constant 0 : i32
    %c0_i32_1 = arith.constant 0 : i32
    %c0_i32_2 = arith.constant 0 : i32
    return %c0_i32, %c0_i32_0, %c0_i32_1 : i32, i32, i32
  }
  func.func @transform_10(%arg0: i32) -> (i32, i32) {
    %c0_i32 = arith.constant 0 : i32
    %c0_i32_0 = arith.constant 0 : i32
    %c0_i32_1 = arith.constant 0 : i32
    return %c0_i32, %c0_i32_0 : i32, i32
  }
  func.func @transform_11(%arg0: i32) -> (i32, i32, i32) {
    %c0_i32 = arith.constant 0 : i32
    %c0_i32_0 = arith.constant 0 : i32
    %c0_i32_1 = arith.constant 0 : i32
    return %arg0, %c0_i32, %c0_i32_0 : i32, i32, i32
  }
}

</mosaic_0001>

<llo_original>
// kernel: tpu_custom_call.1
$region0: #{tpu_custom_call.1}
  #allocation0 [shape = 'u32[]', space=smem, size = 0x4, offset = 0x4, fixed_abs, tag = 'smem constant byte address 0x4 - core index']
  #allocation1 [shape = 'u32[144,128]{1,0:T(1,128)}', space=vmem, size = 0x12000, scoped, tag = 'internal scratch']
  #allocation2 [shape = 'f32[18,64]{1,0:T(8,128)}', space=vmem, size = 0x3000, scoped, tag = 'scratch operand']
  #allocation3 [shape = 'f32[18,128]{1,0:T(8,128)}', space=vmem, size = 0x3000, scoped, tag = 'scratch operand']
  %s0 = inlined_call_operand.vmem [shape: s32[2], index: 0, kind: input, shape index: {}]
  %s1 = inlined_call_operand.vmem [shape: f32[1000], index: 1, kind: input, shape index: {}]
  %s2 = inlined_call_operand.vmem [shape: f32[1000], index: 2, kind: input, shape index: {}]
  %s3 = inlined_call_operand.vmem [shape: f32[2,16,64], index: 3, kind: input, shape index: {}]
  %s4 = inlined_call_operand.vmem [shape: f32[2,16,64], index: 4, kind: input, shape index: {}]
  %s5 = inlined_call_operand.vmem [shape: f32[256,128], index: 5, kind: input, shape index: {}]
  %s6 = inlined_call_operand.vmem [shape: f32[1,128], index: 6, kind: input, shape index: {}]
  %s7 = inlined_call_operand.vmem [shape: f32[3,64,128], index: 7, kind: input, shape index: {}]
  %s8 = inlined_call_operand.vmem [shape: f32[1,128], index: 8, kind: input, shape index: {}]
  %s9 = inlined_call_operand.vmem [shape: f32[3,128,64], index: 9, kind: input, shape index: {}]
  %s10 = inlined_call_operand.vmem [shape: f32[1,64], index: 10, kind: input, shape index: {}]
  %s11 = inlined_call_operand.hbm [shape: f32[2,16,64], index: 11, kind: output, shape index: {}]
  %s12 = sld [smem:[#allocation0]]
  $region89: #{tpu_custom_call.1} parent=0
    _
  %s14 = ssub.s32 1, %s12
  %s15 = scalar_select 0, %s14, %s12
  $region1: #{tpu_custom_call.1} parent=0
    #allocation4 [shape = 'u8[512]{0}', space=smem, size = 0x200, scoped, tag = 'input window, operand 0, single buffered']
    #allocation5 [shape = 's32[2]{0}', space=sflag, size = 0x8, scoped, tag = 'scoped memory for tpu_custom_call.1']
    #allocation6 [shape = 's32[2]{0}', space=sflag, size = 0x8, scoped, tag = 'scoped memory for tpu_custom_call.1']
    #allocation7 [shape = 'u8[4096]{0}', space=smem, size = 0x1000, scoped, tag = 'input window, operand 1, single buffered']
    #allocation8 [shape = 's32[1]{0}', space=sflag, size = 0x4, scoped, tag = 'scoped memory for tpu_custom_call.1']
    #allocation9 [shape = 'u8[4096]{0}', space=smem, size = 0x1000, scoped, tag = 'input window, operand 2, single buffered']
    #allocation10 [shape = 'u8[16384]{0}', space=vmem, size = 0x4000, scoped, tag = 'output window, operand 0']
    %16 = vsyncpa [#allocation6], 0
    %17 = vsyncpa [#allocation8], 0
    %18 = vsyncpa [#allocation5], 0
    %s19 = scalar_lea.sflag [#allocation5], 1
    %20 = vsyncpa %s19, 0
    loop: start=0, step=1, limit=4
    $region2: #{tpu_custom_call.1} parent=1 // loop_pre_header
      _
    $region3: #{tpu_custom_call.1} parent=1 // loop_header
      %s22 = sphi 0, %s26
      %p23 = scmp.ge.s32.totalorder %s22, 4
      %s30 = sphi 0, %s30
      %s32 = sphi 0, %s30
      %s33 = sphi 0, %s32
      %s47 = sphi 0, %s33
      %s51 = sphi 0, %s51
      %s53 = sphi 0, %s51
      %s54 = sphi 0, %s53
      %s68 = sphi 0, %s54
      %s72 = sphi 0, %s72
      %s74 = sphi 0, %s72
      %s75 = sphi 0, %s74
      %s89 = sphi 0, %s75
      %s95 = sphi 0, %s97
      %s98 = sphi 0, %s95
      %s99 = sphi 0, %s98
      %s115 = sphi 0, %s99
      %s121 = sphi 0, %s123
      %s124 = sphi 0, %s121
      %s125 = sphi 0, %s124
      %s141 = sphi 0, %s125
      %s145 = sphi 0, %s145
      %s147 = sphi 0, %s145
      %s148 = sphi 0, %s147
      %s162 = sphi 0, %s148
      %s166 = sphi 0, %s166
      %s168 = sphi 0, %s166
      %s169 = sphi 0, %s168
      %s183 = sphi 0, %s169
      %s187 = sphi 0, %s187
      %s189 = sphi 0, %s187
      %s190 = sphi 0, %s189
      %s204 = sphi 0, %s190
      %s208 = sphi 0, %s208
      %s210 = sphi 0, %s208
      %s211 = sphi 0, %s210
      %s225 = sphi 0, %s211
      %s229 = sphi 0, %s229
      %s231 = sphi 0, %s229
      %s232 = sphi 0, %s231
      %s246 = sphi 0, %s232
      %s250 = sphi 0, %s250
      %s252 = sphi 0, %s250
      %s253 = sphi 0, %s252
      %s267 = sphi 0, %s253
      %s273 = sphi 0, %s275
      %s276 = sphi 0, %s273
      %s277 = sphi 0, %s276
      %s293 = sphi 0, %s277
    $region4: #{tpu_custom_call.1} parent=1 // loop_header_branch
      %25 = sbr.rel (%p23) target = $region8
    $region5: #{tpu_custom_call.1} parent=1 // loop_body
      %s27 = ssub.s32 %s22, 1
      %s28 = ssub.s32 %s22, 2
      %s29 = sadd.s32 %s22, 1
      %s31 = sadd.s32 %s30, 1
      %p34 = scmp.eq.s32.totalorder %s22, 1
      %p35 = scmp.ne.s32.totalorder %s30, %s32
      %p36 = scmp.eq.s32.totalorder %s22, 0
      %p37 = por %p35, %p36
      %p38 = scmp.ne.s32.totalorder %s30, %s32
      %p39 = scmp.eq.s32.totalorder %s27, 1
      %p40 = por %p38, %p39
      %p41 = scmp.ne.s32.totalorder %s32, %s33
      %p42 = scmp.eq.s32.totalorder %s27, 0
      %p43 = por %p41, %p42
      %p44 = scmp.ne.s32.totalorder %s32, %s33
      %p45 = scmp.eq.s32.totalorder %s28, 1
      %p46 = por %p44, %p45
      %p48 = scmp.ne.s32.totalorder %s33, %s47
      %p49 = scmp.eq.s32.totalorder %s28, 0
      %p50 = por %p48, %p49
      %s52 = sadd.s32 %s51, 1
      %p55 = scmp.eq.s32.totalorder %s22, 1
      %p56 = scmp.ne.s32.totalorder %s51, %s53
      %p57 = scmp.eq.s32.totalorder %s22, 0
      %p58 = por %p56, %p57
      %p59 = scmp.ne.s32.totalorder %s51, %s53
      %p60 = scmp.eq.s32.totalorder %s27, 1
      %p61 = por %p59, %p60
      %p62 = scmp.ne.s32.totalorder %s53, %s54
      %p63 = scmp.eq.s32.totalorder %s27, 0
      %p64 = por %p62, %p63
      %p65 = scmp.ne.s32.totalorder %s53, %s54
      %p66 = scmp.eq.s32.totalorder %s28, 1
      %p67 = por %p65, %p66
      %p69 = scmp.ne.s32.totalorder %s54, %s68
      %p70 = scmp.eq.s32.totalorder %s28, 0
      %p71 = por %p69, %p70
      %s73 = sadd.s32 %s72, 1
      %p76 = scmp.eq.s32.totalorder %s22, 1
      %p77 = scmp.ne.s32.totalorder %s72, %s74
      %p78 = scmp.eq.s32.totalorder %s22, 0
      %p79 = por %p77, %p78
      %p80 = scmp.ne.s32.totalorder %s72, %s74
      %p81 = scmp.eq.s32.totalorder %s27, 1
      %p82 = por %p80, %p81
      %p83 = scmp.ne.s32.totalorder %s74, %s75
      %p84 = scmp.eq.s32.totalorder %s27, 0
      %p85 = por %p83, %p84
      %p86 = scmp.ne.s32.totalorder %s74, %s75
      %p87 = scmp.eq.s32.totalorder %s28, 1
      %p88 = por %p86, %p87
      %p90 = scmp.ne.s32.totalorder %s75, %s89
      %p91 = scmp.eq.s32.totalorder %s28, 0
      %p92 = por %p90, %p91
      %s93 = ssub.s32 %s22, %s29
      %p94 = scmp.eq.s32.totalorder %s93, 0
      %s96 = sadd.s32 %s95, 1
      %s97 = scalar_select %p94, %s95, %s96
      %p100 = pneg %p94
      %p101 = scmp.eq.s32.totalorder %s22, 1
      %p102 = por %p100, %p101
      %p103 = scmp.ne.s32.totalorder %s95, %s98
      %p104 = scmp.eq.s32.totalorder %s22, 0
      %p105 = por %p103, %p104
      %p106 = scmp.ne.s32.totalorder %s95, %s98
      %p107 = scmp.eq.s32.totalorder %s27, 1
      %p108 = por %p106, %p107
      %p109 = scmp.ne.s32.totalorder %s98, %s99
      %p110 = scmp.eq.s32.totalorder %s27, 0
      %p111 = por %p109, %p110
      %p112 = scmp.ne.s32.totalorder %s98, %s99
      %p113 = scmp.eq.s32.totalorder %s28, 1
      %p114 = por %p112, %p113
      %p116 = scmp.ne.s32.totalorder %s99, %s115
      %p117 = scmp.eq.s32.totalorder %s28, 0
      %p118 = por %p116, %p117
      %s119 = ssub.s32 %s22, %s29
      %p120 = scmp.eq.s32.totalorder %s119, 0
      %s122 = sadd.s32 %s121, 1
      %s123 = scalar_select %p120, %s121, %s122
      %p126 = pneg %p120
      %p127 = scmp.eq.s32.totalorder %s22, 1
      %p128 = por %p126, %p127
      %p129 = scmp.ne.s32.totalorder %s121, %s124
      %p130 = scmp.eq.s32.totalorder %s22, 0
      %p131 = por %p129, %p130
      %p132 = scmp.ne.s32.totalorder %s121, %s124
      %p133 = scmp.eq.s32.totalorder %s27, 1
      %p134 = por %p132, %p133
      %p135 = scmp.ne.s32.totalorder %s124, %s125
      %p136 = scmp.eq.s32.totalorder %s27, 0
      %p137 = por %p135, %p136
      %p138 = scmp.ne.s32.totalorder %s124, %s125
      %p139 = scmp.eq.s32.totalorder %s28, 1
      %p140 = por %p138, %p139
      %p142 = scmp.ne.s32.totalorder %s125, %s141
      %p143 = scmp.eq.s32.totalorder %s28, 0
      %p144 = por %p142, %p143
      %s146 = sadd.s32 %s145, 1
      %p149 = scmp.eq.s32.totalorder %s22, 1
      %p150 = scmp.ne.s32.totalorder %s145, %s147
      %p151 = scmp.eq.s32.totalorder %s22, 0
      %p152 = por %p150, %p151
      %p153 = scmp.ne.s32.totalorder %s145, %s147
      %p154 = scmp.eq.s32.totalorder %s27, 1
      %p155 = por %p153, %p154
      %p156 = scmp.ne.s32.totalorder %s147, %s148
      %p157 = scmp.eq.s32.totalorder %s27, 0
      %p158 = por %p156, %p157
      %p159 = scmp.ne.s32.totalorder %s147, %s148
      %p160 = scmp.eq.s32.totalorder %s28, 1
      %p161 = por %p159, %p160
      %p163 = scmp.ne.s32.totalorder %s148, %s162
      %p164 = scmp.eq.s32.totalorder %s28, 0
      %p165 = por %p163, %p164
      %s167 = sadd.s32 %s166, 1
      %p170 = scmp.eq.s32.totalorder %s22, 1
      %p171 = scmp.ne.s32.totalorder %s166, %s168
      %p172 = scmp.eq.s32.totalorder %s22, 0
      %p173 = por %p171, %p172
      %p174 = scmp.ne.s32.totalorder %s166, %s168
      %p175 = scmp.eq.s32.totalorder %s27, 1
      %p176 = por %p174, %p175
      %p177 = scmp.ne.s32.totalorder %s168, %s169
      %p178 = scmp.eq.s32.totalorder %s27, 0
      %p179 = por %p177, %p178
      %p180 = scmp.ne.s32.totalorder %s168, %s169
      %p181 = scmp.eq.s32.totalorder %s28, 1
      %p182 = por %p180, %p181
      %p184 = scmp.ne.s32.totalorder %s169, %s183
      %p185 = scmp.eq.s32.totalorder %s28, 0
      %p186 = por %p184, %p185
      %s188 = sadd.s32 %s187, 1
      %p191 = scmp.eq.s32.totalorder %s22, 1
      %p192 = scmp.ne.s32.totalorder %s187, %s189
      %p193 = scmp.eq.s32.totalorder %s22, 0
      %p194 = por %p192, %p193
      %p195 = scmp.ne.s32.totalorder %s187, %s189
      %p196 = scmp.eq.s32.totalorder %s27, 1
      %p197 = por %p195, %p196
      %p198 = scmp.ne.s32.totalorder %s189, %s190
      %p199 = scmp.eq.s32.totalorder %s27, 0
      %p200 = por %p198, %p199
      %p201 = scmp.ne.s32.totalorder %s189, %s190
      %p202 = scmp.eq.s32.totalorder %s28, 1
      %p203 = por %p201, %p202
      %p205 = scmp.ne.s32.totalorder %s190, %s204
      %p206 = scmp.eq.s32.totalorder %s28, 0
      %p207 = por %p205, %p206
      %s209 = sadd.s32 %s208, 1
      %p212 = scmp.eq.s32.totalorder %s22, 1
      %p213 = scmp.ne.s32.totalorder %s208, %s210
      %p214 = scmp.eq.s32.totalorder %s22, 0
      %p215 = por %p213, %p214
      %p216 = scmp.ne.s32.totalorder %s208, %s210
      %p217 = scmp.eq.s32.totalorder %s27, 1
      %p218 = por %p216, %p217
      %p219 = scmp.ne.s32.totalorder %s210, %s211
      %p220 = scmp.eq.s32.totalorder %s27, 0
      %p221 = por %p219, %p220
      %p222 = scmp.ne.s32.totalorder %s210, %s211
      %p223 = scmp.eq.s32.totalorder %s28, 1
      %p224 = por %p222, %p223
      %p226 = scmp.ne.s32.totalorder %s211, %s225
      %p227 = scmp.eq.s32.totalorder %s28, 0
      %p228 = por %p226, %p227
      %s230 = sadd.s32 %s229, 1
      %p233 = scmp.eq.s32.totalorder %s22, 1
      %p234 = scmp.ne.s32.totalorder %s229, %s231
      %p235 = scmp.eq.s32.totalorder %s22, 0
      %p236 = por %p234, %p235
      %p237 = scmp.ne.s32.totalorder %s229, %s231
      %p238 = scmp.eq.s32.totalorder %s27, 1
      %p239 = por %p237, %p238
      %p240 = scmp.ne.s32.totalorder %s231, %s232
      %p241 = scmp.eq.s32.totalorder %s27, 0
      %p242 = por %p240, %p241
      %p243 = scmp.ne.s32.totalorder %s231, %s232
      %p244 = scmp.eq.s32.totalorder %s28, 1
      %p245 = por %p243, %p244
      %p247 = scmp.ne.s32.totalorder %s232, %s246
      %p248 = scmp.eq.s32.totalorder %s28, 0
      %p249 = por %p247, %p248
      %s251 = sadd.s32 %s250, 1
      %p254 = scmp.eq.s32.totalorder %s22, 1
      %p255 = scmp.ne.s32.totalorder %s250, %s252
      %p256 = scmp.eq.s32.totalorder %s22, 0
      %p257 = por %p255, %p256
      %p258 = scmp.ne.s32.totalorder %s250, %s252
      %p259 = scmp.eq.s32.totalorder %s27, 1
      %p260 = por %p258, %p259
      %p261 = scmp.ne.s32.totalorder %s252, %s253
      %p262 = scmp.eq.s32.totalorder %s27, 0
      %p263 = por %p261, %p262
      %p264 = scmp.ne.s32.totalorder %s252, %s253
      %p265 = scmp.eq.s32.totalorder %s28, 1
      %p266 = por %p264, %p265
      %p268 = scmp.ne.s32.totalorder %s253, %s267
      %p269 = scmp.eq.s32.totalorder %s28, 0
      %p270 = por %p268, %p269
      %s271 = ssub.s32 %s22, %s29
      %p272 = scmp.eq.s32.totalorder %s271, 0
      %s274 = sadd.s32 %s273, 1
      %s275 = scalar_select %p272, %s273, %s274
      %p278 = pneg %p272
      %p279 = scmp.eq.s32.totalorder %s22, 1
      %p280 = por %p278, %p279
      %p281 = scmp.ne.s32.totalorder %s273, %s276
      %p282 = scmp.eq.s32.totalorder %s22, 0
      %p283 = por %p281, %p282
      %p284 = scmp.ne.s32.totalorder %s273, %s276
      %p285 = scmp.eq.s32.totalorder %s27, 1
      %p286 = por %p284, %p285
      %p287 = scmp.ne.s32.totalorder %s276, %s277
      %p288 = scmp.eq.s32.totalorder %s27, 0
      %p289 = por %p287, %p288
      %p290 = scmp.ne.s32.totalorder %s276, %s277
      %p291 = scmp.eq.s32.totalorder %s28, 1
      %p292 = por %p290, %p291
      %p294 = scmp.ne.s32.totalorder %s277, %s293
      %p295 = scmp.eq.s32.totalorder %s28, 0
      %p296 = por %p294, %p295
      %p297 = scmp.le.s32.totalorder 1, %s22
      %p298 = scmp.lt.s32.totalorder %s22, 3
      %p299 = pnand %p297, %p298
      %p300 = pneg %p299
      // Predicated region
      $region9: #{tpu_custom_call.1} parent=5 // pred_check
        _
      $region10: #{tpu_custom_call.1} parent=5 // pred_check_branch
        %302 = sbr.rel (%p299) target = $region12
      $region11: #{tpu_custom_call.1} parent=5 // pred_region
        %s303 = ssub.s32 %s22, 1
        // Predicated region
        $region13: #{tpu_custom_call.1} parent=11 // pred_check
          %p304 = pneg %p43
        $region14: #{tpu_custom_call.1} parent=11 // pred_check_branch
          %306 = sbr.rel (%p304) target = $region16
        $region15: #{tpu_custom_call.1} parent=11 // pred_region
          %s308 = ssub.s32 16, 16
          %309 = vsyncadd [#allocation6], %s308
          %s311 = sshll.u32 %s0, 4
          %s312 = int_to_ptr.vmem [resolvable:$true] %s311
          %314 = dma.vmem_to_smem %s312, 16, [#allocation4], [#allocation6]
        $region16: #{tpu_custom_call.1} parent=11 // pred_fallthru
          _
        // Predicated region
        $region17: #{tpu_custom_call.1} parent=11 // pred_check
          %p315 = pneg %p64
        $region18: #{tpu_custom_call.1} parent=11 // pred_check_branch
          %317 = sbr.rel (%p315) target = $region20
        $region19: #{tpu_custom_call.1} parent=11 // pred_region
          %s319 = ssub.s32 128, 128
          %320 = vsyncadd [#allocation8], %s319
          %s322 = sshll.u32 %s1, 4
          %s323 = int_to_ptr.vmem [resolvable:$true] %s322
          %325 = dma.vmem_to_smem %s323, 128, [#allocation7], [#allocation8]
        $region20: #{tpu_custom_call.1} parent=11 // pred_fallthru
          _
        // Predicated region
        $region21: #{tpu_custom_call.1} parent=11 // pred_check
          %p326 = pneg %p85
        $region22: #{tpu_custom_call.1} parent=11 // pred_check_branch
          %328 = sbr.rel (%p326) target = $region24
        $region23: #{tpu_custom_call.1} parent=11 // pred_region
          %s330 = ssub.s32 128, 128
          %331 = vsyncadd [#allocation8], %s330
          %s333 = sshll.u32 %s2, 4
          %s334 = int_to_ptr.vmem [resolvable:$true] %s333
          %336 = dma.vmem_to_smem %s334, 128, [#allocation9], [#allocation8]
        $region24: #{tpu_custom_call.1} parent=11 // pred_fallthru
          _
        // Predicated region
        $region25: #{tpu_custom_call.1} parent=11 // pred_check
          %p337 = pneg %p158
        $region26: #{tpu_custom_call.1} parent=11 // pred_check_branch
          %339 = sbr.rel (%p337) target = $region28
        $region27: #{tpu_custom_call.1} parent=11 // pred_region
          _
        $region28: #{tpu_custom_call.1} parent=11 // pred_fallthru
          _
        // Predicated region
        $region29: #{tpu_custom_call.1} parent=11 // pred_check
          %p340 = pneg %p179
        $region30: #{tpu_custom_call.1} parent=11 // pred_check_branch
          %342 = sbr.rel (%p340) target = $region32
        $region31: #{tpu_custom_call.1} parent=11 // pred_region
          _
        $region32: #{tpu_custom_call.1} parent=11 // pred_fallthru
          _
        // Predicated region
        $region33: #{tpu_custom_call.1} parent=11 // pred_check
          %p343 = pneg %p200
        $region34: #{tpu_custom_call.1} parent=11 // pred_check_branch
          %345 = sbr.rel (%p343) target = $region36
        $region35: #{tpu_custom_call.1} parent=11 // pred_region
          _
        $region36: #{tpu_custom_call.1} parent=11 // pred_fallthru
          _
        // Predicated region
        $region37: #{tpu_custom_call.1} parent=11 // pred_check
          %p346 = pneg %p221
        $region38: #{tpu_custom_call.1} parent=11 // pred_check_branch
          %348 = sbr.rel (%p346) target = $region40
        $region39: #{tpu_custom_call.1} parent=11 // pred_region
          _
        $region40: #{tpu_custom_call.1} parent=11 // pred_fallthru
          _
        // Predicated region
        $region41: #{tpu_custom_call.1} parent=11 // pred_check
          %p349 = pneg %p242
        $region42: #{tpu_custom_call.1} parent=11 // pred_check_branch
          %351 = sbr.rel (%p349) target = $region44
        $region43: #{tpu_custom_call.1} parent=11 // pred_region
          _
        $region44: #{tpu_custom_call.1} parent=11 // pred_fallthru
          _
        // Predicated region
        $region45: #{tpu_custom_call.1} parent=11 // pred_check
          %p352 = pneg %p263
        $region46: #{tpu_custom_call.1} parent=11 // pred_check_branch
          %354 = sbr.rel (%p352) target = $region48
        $region47: #{tpu_custom_call.1} parent=11 // pred_region
          _
        $region48: #{tpu_custom_call.1} parent=11 // pred_fallthru
          _
      $region12: #{tpu_custom_call.1} parent=5 // pred_fallthru
        _
      %p355 = scmp.lt.s32.totalorder %s22, 2
      // Predicated region
      $region49: #{tpu_custom_call.1} parent=5 // pred_check
        %p356 = pneg %p355
      $region50: #{tpu_custom_call.1} parent=5 // pred_check_branch
        %358 = sbr.rel (%p356) target = $region52
      $region51: #{tpu_custom_call.1} parent=5 // pred_region
        // Predicated region
        $region53: #{tpu_custom_call.1} parent=51 // pred_check
          %p359 = pneg %p105
        $region54: #{tpu_custom_call.1} parent=51 // pred_check_branch
          %361 = sbr.rel (%p359) target = $region56
        $region55: #{tpu_custom_call.1} parent=51 // pred_region
          %p362 = scmp.lt.s32.totalorder %s22, 1
          %s363 = scalar_select %p362, %s22, 1
          %s364 = smul.addr %s363, 2
          %s365 = smul.addr %s364, 8
          %s366 = scalar_lea.vmem %s3, %s365
        $region56: #{tpu_custom_call.1} parent=51 // pred_fallthru
          _
        // Predicated region
        $region57: #{tpu_custom_call.1} parent=51 // pred_check
          %p367 = pneg %p131
        $region58: #{tpu_custom_call.1} parent=51 // pred_check_branch
          %369 = sbr.rel (%p367) target = $region60
        $region59: #{tpu_custom_call.1} parent=51 // pred_region
          %p370 = scmp.lt.s32.totalorder %s22, 1
          %s371 = scalar_select %p370, %s22, 1
          %s372 = smul.addr %s371, 2
          %s373 = smul.addr %s372, 8
          %s374 = scalar_lea.vmem %s4, %s373
        $region60: #{tpu_custom_call.1} parent=51 // pred_fallthru
          _
      $region52: #{tpu_custom_call.1} parent=5 // pred_fallthru
        _
      %p375 = scmp.le.s32.totalorder 1, %s22
      %p376 = scmp.lt.s32.totalorder %s22, 3
      %p377 = pnand %p375, %p376
      %p378 = pneg %p377
      // Predicated region
      $region61: #{tpu_custom_call.1} parent=5 // pred_check
        _
      $region62: #{tpu_custom_call.1} parent=5 // pred_check_branch
        %380 = sbr.rel (%p377) target = $region64
      $region63: #{tpu_custom_call.1} parent=5 // pred_region
        %s381 = ssub.s32 %s22, 1
        // Predicated region
        $region65: #{tpu_custom_call.1} parent=63 // pred_check
          %p382 = pneg %p43
        $region66: #{tpu_custom_call.1} parent=63 // pred_check_branch
          %384 = sbr.rel (%p382) target = $region68
        $region67: #{tpu_custom_call.1} parent=63 // pred_region
          %385 = dma.done [#allocation6], 16
        $region68: #{tpu_custom_call.1} parent=63 // pred_fallthru
          _
        // Predicated region
        $region69: #{tpu_custom_call.1} parent=63 // pred_check
          %p386 = pneg %p64
        $region70: #{tpu_custom_call.1} parent=63 // pred_check_branch
          %388 = sbr.rel (%p386) target = $region72
        $region71: #{tpu_custom_call.1} parent=63 // pred_region
          %389 = dma.done [#allocation8], 128
        $region72: #{tpu_custom_call.1} parent=63 // pred_fallthru
          _
        // Predicated region
        $region73: #{tpu_custom_call.1} parent=63 // pred_check
          %p390 = pneg %p85
        $region74: #{tpu_custom_call.1} parent=63 // pred_check_branch
          %392 = sbr.rel (%p390) target = $region76
        $region75: #{tpu_custom_call.1} parent=63 // pred_region
          %393 = dma.done [#allocation8], 128
        $region76: #{tpu_custom_call.1} parent=63 // pred_fallthru
          _
        %394 = sfence
        %p395 = pneg %p43
        %p396 = pneg %p40
        %p397 = pneg %p64
        %p398 = pneg %p61
        %p399 = pneg %p85
        %p400 = pneg %p82
        %p401 = scmp.lt.s32.totalorder %s27, 1
        %s402 = scalar_select %p401, %s27, 1
        %s403 = smul.addr %s402, 2
        %s404 = smul.addr %s403, 8
        %s405 = scalar_lea.vmem %s3, %s404
        %p406 = pneg %p111
        %p407 = pneg %p108
        %p408 = scmp.lt.s32.totalorder %s27, 1
        %s409 = scalar_select %p408, %s27, 1
        %s410 = smul.addr %s409, 2
        %s411 = smul.addr %s410, 8
        %s412 = scalar_lea.vmem %s4, %s411
        %p413 = pneg %p137
        %p414 = pneg %p134
        %p415 = pneg %p158
        %p416 = pneg %p155
        %p417 = pneg %p179
        %p418 = pneg %p176
        %p419 = pneg %p200
        %p420 = pneg %p197
        %p421 = pneg %p221
        %p422 = pneg %p218
        %p423 = pneg %p242
        %p424 = pneg %p239
        %p425 = pneg %p263
        %p426 = pneg %p260
        %p427 = pneg %p289
        %p428 = pneg %p286
        %s429 = sand.u32 %s276, 1
        %s430 = scalar_lea.sflag [#allocation5], %s429
        %s431 = sand.u32 %s276, 1
        %s432 = smul.addr %s431, 16
        %s433 = scalar_lea.vmem [#allocation10], %s432
        %p434 = scmp.lt.s32.totalorder %s27, 1
        %s435 = scalar_select %p434, %s27, 1
        %s436 = smul.addr %s435, 2
        %s437 = smul.addr %s436, 8
        %s438 = scalar_lea.vmem %s3, %s437
        %p439 = scmp.lt.s32.totalorder %s27, 1
        %s440 = scalar_select %p439, %s27, 1
        %s441 = smul.addr %s440, 2
        %s442 = smul.addr %s441, 8
        %s443 = scalar_lea.vmem %s4, %s442
        %s444 = sld [smem:[#allocation4 + %s27]]
        %s445 = sld [smem:[#allocation7 + %s444]]
        %s446 = sld [smem:[#allocation9 + %s444]]
        %v447 = vld [vmem:[%s438] sm:$0xff]
        %v448 = vld [vmem:[%s438 + $0x8] sm:$0xff]
        %v449 = vstv %s445
        %v450 = vmul.f32 %v449, %v447
        %v451 = vmul.f32 %v449, %v448
        %v452 = vld [vmem:[%s443] sm:$0xff]
        %v453 = vld [vmem:[%s443 + $0x8] sm:$0xff]
        %v454 = vstv %s446
        %v455 = vmul.f32 %v454, %v452
        %v456 = vmul.f32 %v454, %v453
        %v457 = vadd.f32 %v450, %v455
        %v458 = vadd.f32 %v451, %v456
        %v459 = vlaneseq
        %v460 = vand.u32 %v459, 127
        %v461 = vcvt.s32.f32 %v460
        %v462 = vmul.f32 %v461, -0.071955785
        %v463 = vmul.f32 %v462, 1.442695
        %v464 = vpow.pop %v463
        %s465 = scvt.s32.f32 %s444
        %v466 = vstv %s465
        %v467 = vmul.f32 %v466, %v464
        %v468 = vand.u32 2147483647, %v467
        %vm469 = vcmp.le.f32.partialorder %v468, 0.7853982
        %vm470 = vcmp.lt.s32.totalorder %v467, 0
        %v471 = vand.u32 %v467, 2139095040
        %v472 = vshrl.u32 %v471, 23
        %v473 = vsub.s32 %v472, 127
        %v474 = vand.u32 2147483647, %v467
        %v475 = vand.u32 %v474, 8388607
        %v476 = vor.u32 %v475, 8388608
        %v477 = vsub.s32 0, %v476
        %v478 = vadd.s32 %v473, 1
        %vm479 = vcmp.gt.s32.totalorder %v478, 0
        %v480 = vsel %vm479, %v478, 0
        %v481 = vshrl.u32 %v480, 5
        %v482 = vand.u32 %v480, 31
        %v483 = vsub.s32 32, %v482
        %v484 = vshrl.u32 683565275, %v483
        %v485 = vshll.u32 683565275, %v482
        %v486 = vshrl.u32 2475754826, %v483
        %v487 = vor.u32 %v485, %v486
        %v488 = vshll.u32 2475754826, %v482
        %v489 = vshrl.u32 2131351028, %v483
        %v490 = vor.u32 %v488, %v489
        %v491 = vshll.u32 2131351028, %v482
        %v492 = vshrl.u32 2102212464, %v483
        %v493 = vor.u32 %v491, %v492
        %v494 = vshll.u32 2102212464, %v482
        %v495 = vshrl.u32 920167782, %v483
        %v496 = vor.u32 %v494, %v495
        %v497 = vshll.u32 920167782, %v482
        %v498 = vshrl.u32 1326507024, %v483
        %v499 = vor.u32 %v497, %v498
        %vm500 = vcmp.lt.s32.totalorder %v481, 1
        %vm501 = vcmp.lt.s32.totalorder %v481, 2
        %vm502 = vcmp.lt.s32.totalorder %v481, 3
        %vm503 = vcmp.lt.s32.totalorder %v481, 4
        %v504 = vsel %vm500, %v484, %v487
        %v505 = vsel %vm503, %v493, 2102212464
        %v506 = vsel %vm502, %v490, %v505
        %v507 = vsel %vm501, %v504, %v506
        %v508 = vsel %vm500, %v487, %v490
        %v509 = vsel %vm503, %v496, 920167782
        %v510 = vsel %vm502, %v493, %v509
        %v511 = vsel %vm501, %v508, %v510
        %v512 = vsel %vm500, %v490, %v493
        %v513 = vsel %vm503, %v499, 1326507024
        %v514 = vsel %vm502, %v496, %v513
        %v515 = vsel %vm501, %v512, %v514
        %v516 = vshll.u32 %v476, 8
        %v517 = vmul.u32.u64.compose %v516, %v515
        %v518 = vextract.low.u32 %v517
        %v519 = vextract.high.u32 %v517
        %v520 = vmul.u32.u64.compose %v516, %v511
        %v521 = vextract.low.u32 %v520
        %v522 = vextract.high.u32 %v520
        %v523 = vmul.u32 %v516, %v507
        %v524 = vadd.s32 %v519, %v521
        %vm525 = vc.u32 %v519, %v521
        %v526 = vadd.s32 %v522, 1
        %v527 = vsel %vm525, %v526, %v522
        %v528 = vadd.s32 %v523, %v527
        %v529 = vadd.s32 %v528, 536870912
        %v530 = vshrl.u32 %v529, 30
        %v531 = vshll.u32 %v530, 30
        %v532 = vsub.s32 %v528, %v531
        %vm533 = vcmp.lt.s32.totalorder %v532, 0
        %v534 = vsub.s32 0, %v532
        %v535 = vsel %vm533, %v534, %v532
        %v536 = vclz %v535
        %v537 = vsub.s32 %v536, 2
        %vm538 = vcmp.gt.s32.totalorder 0, %v537
        %v539 = vsel %vm538, 0, %v537
        %v540 = vsub.s32 32, %v539
        %v541 = vshll.u32 %v532, %v539
        %v542 = vshrl.u32 %v524, %v540
        %v543 = vor.u32 %v541, %v542
        %v544 = vsub.s32 4294967266, %v539
        %v545 = vadd.s32 %v544, 127
        %v546 = vshll.u32 %v545, 23
        %v547 = vor.u32 4788187, %v546
        %v548 = vand.u32 2147483647, %v547
        %v550 = vcvt.s32.f32 %v543
        %v551 = vmul.f32 %v550, %v548
        %v552 = vxor.u32 %v551, 2147483648
        %v553 = vsel %vm470, %v552, %v551
        %v554 = vsub.s32 4, %v530
        %v555 = vsel %vm470, %v554, %v530
        %v556 = vsel %vm469, %v467, %v553
        %v557 = vsel %vm469, 0, %v555
        %v558 = vcosq.f32.pop %v556
        %v559 = vsinq.f32.pop %v556
        %vm560 = vweird.f32 %v467
        %v561 = vadd.s32 %v557, 3
        %v562 = vand.u32 %v561, 3
        %vm563 = vcmp.lt.s32.totalorder %v562, 2
        %vm564 = vcmp.eq.s32.totalorder %v562, 0
        %v565 = vxor.u32 %v559, 2147483648
        %v566 = vsel %vm564, %v558, %v565
        %vm567 = vcmp.eq.s32.totalorder %v562, 2
        %v568 = vxor.u32 %v558, 2147483648
        %v569 = vsel %vm567, %v568, %v559
        %v570 = vsel %vm563, %v566, %v569
        %v571 = vsel %vm560, nan, %v570
        %v572 = vand.u32 2147483647, %v467
        %vm573 = vcmp.le.f32.partialorder %v572, 0.7853982
        %vm574 = vcmp.lt.s32.totalorder %v467, 0
        %v575 = vand.u32 %v467, 2139095040
        %v576 = vshrl.u32 %v575, 23
        %v577 = vsub.s32 %v576, 127
        %v578 = vand.u32 2147483647, %v467
        %v579 = vand.u32 %v578, 8388607
        %v580 = vor.u32 %v579, 8388608
        %v581 = vsub.s32 0, %v580
        %v582 = vadd.s32 %v577, 1
        %vm583 = vcmp.gt.s32.totalorder %v582, 0
        %v584 = vsel %vm583, %v582, 0
        %v585 = vshrl.u32 %v584, 5
        %v586 = vand.u32 %v584, 31
        %v587 = vsub.s32 32, %v586
        %v588 = vshrl.u32 683565275, %v587
        %v589 = vshll.u32 683565275, %v586
        %v590 = vshrl.u32 2475754826, %v587
        %v591 = vor.u32 %v589, %v590
        %v592 = vshll.u32 2475754826, %v586
        %v593 = vshrl.u32 2131351028, %v587
        %v594 = vor.u32 %v592, %v593
        %v595 = vshll.u32 2131351028, %v586
        %v596 = vshrl.u32 2102212464, %v587
        %v597 = vor.u32 %v595, %v596
        %v598 = vshll.u32 2102212464, %v586
        %v599 = vshrl.u32 920167782, %v587
        %v600 = vor.u32 %v598, %v599
        %v601 = vshll.u32 920167782, %v586
        %v602 = vshrl.u32 1326507024, %v587
        %v603 = vor.u32 %v601, %v602
        %vm604 = vcmp.lt.s32.totalorder %v585, 1
        %vm605 = vcmp.lt.s32.totalorder %v585, 2
        %vm606 = vcmp.lt.s32.totalorder %v585, 3
        %vm607 = vcmp.lt.s32.totalorder %v585, 4
        %v608 = vsel %vm604, %v588, %v591
        %v609 = vsel %vm607, %v597, 2102212464
        %v610 = vsel %vm606, %v594, %v609
        %v611 = vsel %vm605, %v608, %v610
        %v612 = vsel %vm604, %v591, %v594
        %v613 = vsel %vm607, %v600, 920167782
        %v614 = vsel %vm606, %v597, %v613
        %v615 = vsel %vm605, %v612, %v614
        %v616 = vsel %vm604, %v594, %v597
        %v617 = vsel %vm607, %v603, 1326507024
        %v618 = vsel %vm606, %v600, %v617
        %v619 = vsel %vm605, %v616, %v618
        %v620 = vshll.u32 %v580, 8
        %v621 = vmul.u32.u64.compose %v620, %v619
        %v622 = vextract.low.u32 %v621
        %v623 = vextract.high.u32 %v621
        %v624 = vmul.u32.u64.compose %v620, %v615
        %v625 = vextract.low.u32 %v624
        %v626 = vextract.high.u32 %v624
        %v627 = vmul.u32 %v620, %v611
        %v628 = vadd.s32 %v623, %v625
        %vm629 = vc.u32 %v623, %v625
        %v630 = vadd.s32 %v626, 1
        %v631 = vsel %vm629, %v630, %v626
        %v632 = vadd.s32 %v627, %v631
        %v633 = vadd.s32 %v632, 536870912
        %v634 = vshrl.u32 %v633, 30
        %v635 = vshll.u32 %v634, 30
        %v636 = vsub.s32 %v632, %v635
        %vm637 = vcmp.lt.s32.totalorder %v636, 0
        %v638 = vsub.s32 0, %v636
        %v639 = vsel %vm637, %v638, %v636
        %v640 = vclz %v639
        %v641 = vsub.s32 %v640, 2
        %vm642 = vcmp.gt.s32.totalorder 0, %v641
        %v643 = vsel %vm642, 0, %v641
        %v644 = vsub.s32 32, %v643
        %v645 = vshll.u32 %v636, %v643
        %v646 = vshrl.u32 %v628, %v644
        %v647 = vor.u32 %v645, %v646
        %v648 = vsub.s32 4294967266, %v643
        %v649 = vadd.s32 %v648, 127
        %v650 = vshll.u32 %v649, 23
        %v651 = vor.u32 4788187, %v650
        %v652 = vand.u32 2147483647, %v651
        %v654 = vcvt.s32.f32 %v647
        %v655 = vmul.f32 %v654, %v652
        %v656 = vxor.u32 %v655, 2147483648
        %v657 = vsel %vm574, %v656, %v655
        %v658 = vsub.s32 4, %v634
        %v659 = vsel %vm574, %v658, %v634
        %v660 = vsel %vm573, %v467, %v657
        %v661 = vsel %vm573, 0, %v659
        %v662 = vcosq.f32.pop %v660
        %v663 = vsinq.f32.pop %v660
        %vm664 = vweird.f32 %v467
        %v665 = vand.u32 %v661, 3
        %vm666 = vcmp.lt.s32.totalorder %v665, 2
        %vm667 = vcmp.eq.s32.totalorder %v665, 0
        %v668 = vxor.u32 %v663, 2147483648
        %v669 = vsel %vm667, %v662, %v668
        %vm670 = vcmp.eq.s32.totalorder %v665, 2
        %v671 = vxor.u32 %v662, 2147483648
        %v672 = vsel %vm670, %v671, %v663
        %v673 = vsel %vm666, %v669, %v672
        %v674 = vsel %vm664, nan, %v673
        %v675 = vld [vmem:[%s5] sm:$0xff]
        %v676 = vld [vmem:[%s5 + $0x8] sm:$0xff]
        %v677 = vld [vmem:[%s5 + $0x10] sm:$0xff]
        %v678 = vld [vmem:[%s5 + $0x18] sm:$0xff]
        %v679 = vld [vmem:[%s5 + $0x20] sm:$0xff]
        %v680 = vld [vmem:[%s5 + $0x28] sm:$0xff]
        %v681 = vld [vmem:[%s5 + $0x30] sm:$0xff]
        %v682 = vld [vmem:[%s5 + $0x38] sm:$0xff]
        %v683 = vld [vmem:[%s5 + $0x40] sm:$0xff]
        %v684 = vld [vmem:[%s5 + $0x48] sm:$0xff]
        %v685 = vld [vmem:[%s5 + $0x50] sm:$0xff]
        %v686 = vld [vmem:[%s5 + $0x58] sm:$0xff]
        %v687 = vld [vmem:[%s5 + $0x60] sm:$0xff]
        %v688 = vld [vmem:[%s5 + $0x68] sm:$0xff]
        %v689 = vld [vmem:[%s5 + $0x70] sm:$0xff]
        %v690 = vld [vmem:[%s5 + $0x78] sm:$0xff]
        %v691 = vld [vmem:[%s5 + $0x80] sm:$0xff]
        %v692 = vld [vmem:[%s5 + $0x88] sm:$0xff]
        %v693 = vld [vmem:[%s5 + $0x90] sm:$0xff]
        %v694 = vld [vmem:[%s5 + $0x98] sm:$0xff]
        %v695 = vld [vmem:[%s5 + $0xa0] sm:$0xff]
        %v696 = vld [vmem:[%s5 + $0xa8] sm:$0xff]
        %v697 = vld [vmem:[%s5 + $0xb0] sm:$0xff]
        %v698 = vld [vmem:[%s5 + $0xb8] sm:$0xff]
        %v699 = vld [vmem:[%s5 + $0xc0] sm:$0xff]
        %v700 = vld [vmem:[%s5 + $0xc8] sm:$0xff]
        %v701 = vld [vmem:[%s5 + $0xd0] sm:$0xff]
        %v702 = vld [vmem:[%s5 + $0xd8] sm:$0xff]
        %v703 = vld [vmem:[%s5 + $0xe0] sm:$0xff]
        %v704 = vld [vmem:[%s5 + $0xe8] sm:$0xff]
        %v705 = vld [vmem:[%s5 + $0xf0] sm:$0xff]
        %v706 = vld [vmem:[%s5 + $0xf8] sm:$0xff]
        %v707 = vld [vmem:[%s6] sm:$0x1]
        %708 = vmatprep.subr.mxu0 0.0
        %709 = vmatpush1.msra.mxu0 %v690
        %710 = vmatprep.subr.mxu0 0.0
        %711 = vmatpush1.msra.mxu0 %v689
        %712 = vmatprep.subr.mxu0 0.0
        %713 = vmatpush1.msra.mxu0 %v688
        %714 = vmatprep.subr.mxu0 0.0
        %715 = vmatpush1.msra.mxu0 %v687
        %716 = vmatprep.subr.mxu0 0.0
        %717 = vmatpush1.msra.mxu0 %v686
        %718 = vmatprep.subr.mxu0 0.0
        %719 = vmatpush1.msra.mxu0 %v685
        %720 = vmatprep.subr.mxu0 0.0
        %721 = vmatpush1.msra.mxu0 %v684
        %722 = vmatprep.subr.mxu0 0.0
        %723 = vmatpush1.msra.mxu0 %v683
        %724 = vmatprep.subr.mxu0 0.0
        %725 = vmatpush1.msra.mxu0 %v682
        %726 = vmatprep.subr.mxu0 0.0
        %727 = vmatpush1.msra.mxu0 %v681
        %728 = vmatprep.subr.mxu0 0.0
        %729 = vmatpush1.msra.mxu0 %v680
        %730 = vmatprep.subr.mxu0 0.0
        %731 = vmatpush1.msra.mxu0 %v679
        %732 = vmatprep.subr.mxu0 0.0
        %733 = vmatpush1.msra.mxu0 %v678
        %734 = vmatprep.subr.mxu0 0.0
        %735 = vmatpush1.msra.mxu0 %v677
        %736 = vmatprep.subr.mxu0 0.0
        %737 = vmatpush1.msra.mxu0 %v676
        %738 = vmatprep.subr.mxu0 0.0
        %739 = vmatpush1.msra.mxu0 %v675
        %740 = vmatprep.subr.mxu0 0.0
        %741 = vmatpush2.msra.mxu0 %v706
        %742 = vmatprep.subr.mxu0 0.0
        %743 = vmatpush2.msra.mxu0 %v705
        %744 = vmatprep.subr.mxu0 0.0
        %745 = vmatpush2.msra.mxu0 %v704
        %746 = vmatprep.subr.mxu0 0.0
        %747 = vmatpush2.msra.mxu0 %v703
        %748 = vmatprep.subr.mxu0 0.0
        %749 = vmatpush2.msra.mxu0 %v702
        %750 = vmatprep.subr.mxu0 0.0
        %751 = vmatpush2.msra.mxu0 %v701
        %752 = vmatprep.subr.mxu0 0.0
        %753 = vmatpush2.msra.mxu0 %v700
        %754 = vmatprep.subr.mxu0 0.0
        %755 = vmatpush2.msra.mxu0 %v699
        %756 = vmatprep.subr.mxu0 0.0
        %757 = vmatpush2.msra.mxu0 %v698
        %758 = vmatprep.subr.mxu0 0.0
        %759 = vmatpush2.msra.mxu0 %v697
        %760 = vmatprep.subr.mxu0 0.0
        %761 = vmatpush2.msra.mxu0 %v696
        %762 = vmatprep.subr.mxu0 0.0
        %763 = vmatpush2.msra.mxu0 %v695
        %764 = vmatprep.subr.mxu0 0.0
        %765 = vmatpush2.msra.mxu0 %v694
        %766 = vmatprep.subr.mxu0 0.0
        %767 = vmatpush2.msra.mxu0 %v693
        %768 = vmatprep.subr.mxu0 0.0
        %769 = vmatpush2.msra.mxu0 %v692
        %770 = vmatprep.subr.mxu0 0.0
        %771 = vmatpush2.msra.mxu0 %v691
        %772 = vmatprep.mubr.f32.mxu0 %v674
        %773 = vmatmul.mubr.f32.gmra.mxu0 %v571
        %v774 = vpop.f32.mrf.mxu0
        %v775 = vadd.f32 %v707, %v774
        %v776 = vpop.f32.mrf.mxu0
        %777 = vdwg.mxu0
        %v778 = vmax.f32 %v775, 0.0
        %vm779 = vcmask 516096
        %780 = vst.msk [vmem:[#allocation2] sm:$0x1] %vm779, 0.0
        %781 = vst.msk [vmem:[#allocation2 + $0x11] sm:$0x1] %vm779, 0.0
        %vm782 = vcmask 523264
        %783 = vst.msk [vmem:[#allocation2 + $0x1] sm:$0xff] %vm782, %v457
        %784 = vst.msk [vmem:[#allocation2 + $0x9] sm:$0xff] %vm782, %v458
        %v785 = vld [vmem:[#allocation2] sm:$0xff]
        %v786 = vld [vmem:[#allocation2 + $0x8] sm:$0xff]
        %v787 = vld [vmem:[%s7] sm:$0xff]
        %v788 = vld [vmem:[%s7 + $0x8] sm:$0xff]
        %v789 = vld [vmem:[%s7 + $0x10] sm:$0xff]
        %v790 = vld [vmem:[%s7 + $0x18] sm:$0xff]
        %v791 = vld [vmem:[%s7 + $0x20] sm:$0xff]
        %v792 = vld [vmem:[%s7 + $0x28] sm:$0xff]
        %v793 = vld [vmem:[%s7 + $0x30] sm:$0xff]
        %v794 = vld [vmem:[%s7 + $0x38] sm:$0xff]
        %v795 = vld [vmem:[#allocation2 + $0x1] sm:$0xff]
        %v796 = vld [vmem:[#allocation2 + $0x9] sm:$0xff]
        %s797 = scalar_lea.vmem %s7, 64
        %v798 = vld [vmem:[%s797] sm:$0xff]
        %v799 = vld [vmem:[%s797 + $0x8] sm:$0xff]
        %v800 = vld [vmem:[%s797 + $0x10] sm:$0xff]
        %v801 = vld [vmem:[%s797 + $0x18] sm:$0xff]
        %v802 = vld [vmem:[%s797 + $0x20] sm:$0xff]
        %v803 = vld [vmem:[%s797 + $0x28] sm:$0xff]
        %v804 = vld [vmem:[%s797 + $0x30] sm:$0xff]
        %v805 = vld [vmem:[%s797 + $0x38] sm:$0xff]
        %v807 = vsel %vm782, %v795, 0
        %v810 = vsel %vm782, %v796, 0
        %812 = vmatprep.subr.mxu0 0.0
        %813 = vmatpush1.msra.mxu0 0.0
        %814 = vmatprep.subr.mxu0 0.0
        %815 = vmatpush1.msra.mxu0 0.0
        %816 = vmatprep.subr.mxu0 0.0
        %817 = vmatpush1.msra.mxu0 0.0
        %818 = vmatprep.subr.mxu0 0.0
        %819 = vmatpush1.msra.mxu0 0.0
        %820 = vmatprep.subr.mxu0 0.0
        %821 = vmatpush1.msra.mxu0 0.0
        %822 = vmatprep.subr.mxu0 0.0
        %823 = vmatpush1.msra.mxu0 0.0
        %824 = vmatprep.subr.mxu0 0.0
        %825 = vmatpush1.msra.mxu0 0.0
        %826 = vmatprep.subr.mxu0 0.0
        %827 = vmatpush1.msra.mxu0 0.0
        %828 = vmatprep.subr.mxu0 0.0
        %829 = vmatpush1.msra.mxu0 %v805
        %830 = vmatprep.subr.mxu0 0.0
        %831 = vmatpush1.msra.mxu0 %v804
        %832 = vmatprep.subr.mxu0 0.0
        %833 = vmatpush1.msra.mxu0 %v803
        %834 = vmatprep.subr.mxu0 0.0
        %835 = vmatpush1.msra.mxu0 %v802
        %836 = vmatprep.subr.mxu0 0.0
        %837 = vmatpush1.msra.mxu0 %v801
        %838 = vmatprep.subr.mxu0 0.0
        %839 = vmatpush1.msra.mxu0 %v800
        %840 = vmatprep.subr.mxu0 0.0
        %841 = vmatpush1.msra.mxu0 %v799
        %842 = vmatprep.subr.mxu0 0.0
        %843 = vmatpush1.msra.mxu0 %v798
        %844 = vmatprep.subr.mxu0 0.0
        %845 = vmatpush2.msra.mxu0 0.0
        %846 = vmatprep.subr.mxu0 0.0
        %847 = vmatpush2.msra.mxu0 0.0
        %848 = vmatprep.subr.mxu0 0.0
        %849 = vmatpush2.msra.mxu0 0.0
        %850 = vmatprep.subr.mxu0 0.0
        %851 = vmatpush2.msra.mxu0 0.0
        %852 = vmatprep.subr.mxu0 0.0
        %853 = vmatpush2.msra.mxu0 0.0
        %854 = vmatprep.subr.mxu0 0.0
        %855 = vmatpush2.msra.mxu0 0.0
        %856 = vmatprep.subr.mxu0 0.0
        %857 = vmatpush2.msra.mxu0 0.0
        %858 = vmatprep.subr.mxu0 0.0
        %859 = vmatpush2.msra.mxu0 0.0
        %860 = vmatprep.subr.mxu0 0.0
        %861 = vmatpush2.msra.mxu0 0.0
        %862 = vmatprep.subr.mxu0 0.0
        %863 = vmatpush2.msra.mxu0 0.0
        %864 = vmatprep.subr.mxu0 0.0
        %865 = vmatpush2.msra.mxu0 0.0
        %866 = vmatprep.subr.mxu0 0.0
        %867 = vmatpush2.msra.mxu0 0.0
        %868 = vmatprep.subr.mxu0 0.0
        %869 = vmatpush2.msra.mxu0 0.0
        %870 = vmatprep.subr.mxu0 0.0
        %871 = vmatpush2.msra.mxu0 0.0
        %872 = vmatprep.subr.mxu0 0.0
        %873 = vmatpush2.msra.mxu0 0.0
        %874 = vmatprep.subr.mxu0 0.0
        %875 = vmatpush2.msra.mxu0 0.0
        %876 = vmatprep.mubr.f32.mxu0 0.0
        %877 = vmatmul.mubr.f32.gmra.mxu0 %v807
        %v878 = vpop.f32.mrf.mxu0
        %v879 = vadd.f32 0.0, %v878
        %v880 = vpop.f32.mrf.mxu0
        %881 = vmatprep.mubr.f32.mxu0 0.0
        %882 = vmatmul.mubr.f32.gmra.mxu0 %v810
        %v883 = vpop.f32.mrf.mxu0
        %v884 = vadd.f32 0.0, %v883
        %v885 = vpop.f32.mrf.mxu0
        %886 = vdwg.mxu0
        %v888 = vsel %vm782, %v785, 0
        %v891 = vsel %vm782, %v786, 0
        %893 = vmatprep.subr.mxu0 0.0
        %894 = vmatpush1.msra.mxu0 0.0
        %895 = vmatprep.subr.mxu0 0.0
        %896 = vmatpush1.msra.mxu0 0.0
        %897 = vmatprep.subr.mxu0 0.0
        %898 = vmatpush1.msra.mxu0 0.0
        %899 = vmatprep.subr.mxu0 0.0
        %900 = vmatpush1.msra.mxu0 0.0
        %901 = vmatprep.subr.mxu0 0.0
        %902 = vmatpush1.msra.mxu0 0.0
        %903 = vmatprep.subr.mxu0 0.0
        %904 = vmatpush1.msra.mxu0 0.0
        %905 = vmatprep.subr.mxu0 0.0
        %906 = vmatpush1.msra.mxu0 0.0
        %907 = vmatprep.subr.mxu0 0.0
        %908 = vmatpush1.msra.mxu0 0.0
        %909 = vmatprep.subr.mxu0 0.0
        %910 = vmatpush1.msra.mxu0 %v794
        %911 = vmatprep.subr.mxu0 0.0
        %912 = vmatpush1.msra.mxu0 %v793
        %913 = vmatprep.subr.mxu0 0.0
        %914 = vmatpush1.msra.mxu0 %v792
        %915 = vmatprep.subr.mxu0 0.0
        %916 = vmatpush1.msra.mxu0 %v791
        %917 = vmatprep.subr.mxu0 0.0
        %918 = vmatpush1.msra.mxu0 %v790
        %919 = vmatprep.subr.mxu0 0.0
        %920 = vmatpush1.msra.mxu0 %v789
        %921 = vmatprep.subr.mxu0 0.0
        %922 = vmatpush1.msra.mxu0 %v788
        %923 = vmatprep.subr.mxu0 0.0
        %924 = vmatpush1.msra.mxu0 %v787
        %925 = vmatprep.subr.mxu0 0.0
        %926 = vmatpush2.msra.mxu0 0.0
        %927 = vmatprep.subr.mxu0 0.0
        %928 = vmatpush2.msra.mxu0 0.0
        %929 = vmatprep.subr.mxu0 0.0
        %930 = vmatpush2.msra.mxu0 0.0
        %931 = vmatprep.subr.mxu0 0.0
        %932 = vmatpush2.msra.mxu0 0.0
        %933 = vmatprep.subr.mxu0 0.0
        %934 = vmatpush2.msra.mxu0 0.0
        %935 = vmatprep.subr.mxu0 0.0
        %936 = vmatpush2.msra.mxu0 0.0
        %937 = vmatprep.subr.mxu0 0.0
        %938 = vmatpush2.msra.mxu0 0.0
        %939 = vmatprep.subr.mxu0 0.0
        %940 = vmatpush2.msra.mxu0 0.0
        %941 = vmatprep.subr.mxu0 0.0
        %942 = vmatpush2.msra.mxu0 0.0
        %943 = vmatprep.subr.mxu0 0.0
        %944 = vmatpush2.msra.mxu0 0.0
        %945 = vmatprep.subr.mxu0 0.0
        %946 = vmatpush2.msra.mxu0 0.0
        %947 = vmatprep.subr.mxu0 0.0
        %948 = vmatpush2.msra.mxu0 0.0
        %949 = vmatprep.subr.mxu0 0.0
        %950 = vmatpush2.msra.mxu0 0.0
        %951 = vmatprep.subr.mxu0 0.0
        %952 = vmatpush2.msra.mxu0 0.0
        %953 = vmatprep.subr.mxu0 0.0
        %954 = vmatpush2.msra.mxu0 0.0
        %955 = vmatprep.subr.mxu0 0.0
        %956 = vmatpush2.msra.mxu0 0.0
        %957 = vmatprep.mubr.f32.mxu0 0.0
        %958 = vmatmul.mubr.f32.gmra.mxu0 %v888
        %v959 = vpop.f32.mrf.mxu0
        %v960 = vadd.f32 %v879, %v959
        %v961 = vpop.f32.mrf.mxu0
        %962 = vmatprep.mubr.f32.mxu0 0.0
        %963 = vmatmul.mubr.f32.gmra.mxu0 %v891
        %v964 = vpop.f32.mrf.mxu0
        %v965 = vadd.f32 %v884, %v964
        %v966 = vpop.f32.mrf.mxu0
        %967 = vdwg.mxu0
        %v968 = vld [vmem:[#allocation2 + $0x2] sm:$0xff]
        %v969 = vld [vmem:[#allocation2 + $0xa] sm:$0xff]
        %s970 = scalar_lea.vmem %s7, 128
        %v971 = vld [vmem:[%s970] sm:$0xff]
        %v972 = vld [vmem:[%s970 + $0x8] sm:$0xff]
        %v973 = vld [vmem:[%s970 + $0x10] sm:$0xff]
        %v974 = vld [vmem:[%s970 + $0x18] sm:$0xff]
        %v975 = vld [vmem:[%s970 + $0x20] sm:$0xff]
        %v976 = vld [vmem:[%s970 + $0x28] sm:$0xff]
        %v977 = vld [vmem:[%s970 + $0x30] sm:$0xff]
        %v978 = vld [vmem:[%s970 + $0x38] sm:$0xff]
        %v980 = vsel %vm782, %v968, 0
        %v983 = vsel %vm782, %v969, 0
        %985 = vmatprep.subr.mxu0 0.0
        %986 = vmatpush1.msra.mxu0 0.0
        %987 = vmatprep.subr.mxu0 0.0
        %988 = vmatpush1.msra.mxu0 0.0
        %989 = vmatprep.subr.mxu0 0.0
        %990 = vmatpush1.msra.mxu0 0.0
        %991 = vmatprep.subr.mxu0 0.0
        %992 = vmatpush1.msra.mxu0 0.0
        %993 = vmatprep.subr.mxu0 0.0
        %994 = vmatpush1.msra.mxu0 0.0
        %995 = vmatprep.subr.mxu0 0.0
        %996 = vmatpush1.msra.mxu0 0.0
        %997 = vmatprep.subr.mxu0 0.0
        %998 = vmatpush1.msra.mxu0 0.0
        %999 = vmatprep.subr.mxu0 0.0
        %1000 = vmatpush1.msra.mxu0 0.0
        %1001 = vmatprep.subr.mxu0 0.0
        %1002 = vmatpush1.msra.mxu0 %v978
        %1003 = vmatprep.subr.mxu0 0.0
        %1004 = vmatpush1.msra.mxu0 %v977
        %1005 = vmatprep.subr.mxu0 0.0
        %1006 = vmatpush1.msra.mxu0 %v976
        %1007 = vmatprep.subr.mxu0 0.0
        %1008 = vmatpush1.msra.mxu0 %v975
        %1009 = vmatprep.subr.mxu0 0.0
        %1010 = vmatpush1.msra.mxu0 %v974
        %1011 = vmatprep.subr.mxu0 0.0
        %1012 = vmatpush1.msra.mxu0 %v973
        %1013 = vmatprep.subr.mxu0 0.0
        %1014 = vmatpush1.msra.mxu0 %v972
        %1015 = vmatprep.subr.mxu0 0.0
        %1016 = vmatpush1.msra.mxu0 %v971
        %1017 = vmatprep.subr.mxu0 0.0
        %1018 = vmatpush2.msra.mxu0 0.0
        %1019 = vmatprep.subr.mxu0 0.0
        %1020 = vmatpush2.msra.mxu0 0.0
        %1021 = vmatprep.subr.mxu0 0.0
        %1022 = vmatpush2.msra.mxu0 0.0
        %1023 = vmatprep.subr.mxu0 0.0
        %1024 = vmatpush2.msra.mxu0 0.0
        %1025 = vmatprep.subr.mxu0 0.0
        %1026 = vmatpush2.msra.mxu0 0.0
        %1027 = vmatprep.subr.mxu0 0.0
        %1028 = vmatpush2.msra.mxu0 0.0
        %1029 = vmatprep.subr.mxu0 0.0
        %1030 = vmatpush2.msra.mxu0 0.0
        %1031 = vmatprep.subr.mxu0 0.0
        %1032 = vmatpush2.msra.mxu0 0.0
        %1033 = vmatprep.subr.mxu0 0.0
        %1034 = vmatpush2.msra.mxu0 0.0
        %1035 = vmatprep.subr.mxu0 0.0
        %1036 = vmatpush2.msra.mxu0 0.0
        %1037 = vmatprep.subr.mxu0 0.0
        %1038 = vmatpush2.msra.mxu0 0.0
        %1039 = vmatprep.subr.mxu0 0.0
        %1040 = vmatpush2.msra.mxu0 0.0
        %1041 = vmatprep.subr.mxu0 0.0
        %1042 = vmatpush2.msra.mxu0 0.0
        %1043 = vmatprep.subr.mxu0 0.0
        %1044 = vmatpush2.msra.mxu0 0.0
        %1045 = vmatprep.subr.mxu0 0.0
        %1046 = vmatpush2.msra.mxu0 0.0
        %1047 = vmatprep.subr.mxu0 0.0
        %1048 = vmatpush2.msra.mxu0 0.0
        %1049 = vmatprep.mubr.f32.mxu0 0.0
        %1050 = vmatmul.mubr.f32.gmra.mxu0 %v980
        %v1051 = vpop.f32.mrf.mxu0
        %v1052 = vadd.f32 0.0, %v1051
        %v1053 = vpop.f32.mrf.mxu0
        %1054 = vmatprep.mubr.f32.mxu0 0.0
        %1055 = vmatmul.mubr.f32.gmra.mxu0 %v983
        %v1056 = vpop.f32.mrf.mxu0
        %v1057 = vadd.f32 0.0, %v1056
        %v1058 = vpop.f32.mrf.mxu0
        %1059 = vdwg.mxu0
        %v1060 = vadd.f32 %v960, %v1052
        %v1061 = vadd.f32 %v965, %v1057
        %v1062 = vld [vmem:[%s8] sm:$0x1]
        %v1064 = vlaneseq
        %v1065 = vshrl.u32 %v1064, 7
        %v1066 = vsub.s32 0, %v1065
        %v1067 = vrot.slane %v1062, %v1066
        %v1069 = vadd.f32 %v1060, %v1067
        %v1070 = vadd.f32 %v1061, %v1067
        %v1071 = vlaneseq
        %v1072 = vshrl.u32 %v1071, 7
        %v1073 = vsub.s32 0, %v1072
        %v1074 = vrot.slane %v778, %v1073
        %v1075 = vadd.f32 %v1069, %v1074
        %v1076 = vadd.f32 %v1070, %v1074
        %v1077 = vmax.f32 %v1075, 0.0
        %v1078 = vmax.f32 %v1076, 0.0
        %1079 = vst [vmem:[#allocation3] sm:$0x1] 0.0
        %1080 = vst [vmem:[#allocation3 + $0x11] sm:$0x1] 0.0
        %1081 = vst [vmem:[#allocation3 + $0x1] sm:$0xff] %v1077
        %1082 = vst [vmem:[#allocation3 + $0x9] sm:$0xff] %v1078
        %v1083 = vld [vmem:[#allocation3] sm:$0xff]
        %v1084 = vld [vmem:[#allocation3 + $0x8] sm:$0xff]
        %v1085 = vld [vmem:[%s9] sm:$0xff]
        %v1086 = vld [vmem:[%s9 + $0x8] sm:$0xff]
        %v1087 = vld [vmem:[%s9 + $0x10] sm:$0xff]
        %v1088 = vld [vmem:[%s9 + $0x18] sm:$0xff]
        %v1089 = vld [vmem:[%s9 + $0x20] sm:$0xff]
        %v1090 = vld [vmem:[%s9 + $0x28] sm:$0xff]
        %v1091 = vld [vmem:[%s9 + $0x30] sm:$0xff]
        %v1092 = vld [vmem:[%s9 + $0x38] sm:$0xff]
        %v1093 = vld [vmem:[%s9 + $0x40] sm:$0xff]
        %v1094 = vld [vmem:[%s9 + $0x48] sm:$0xff]
        %v1095 = vld [vmem:[%s9 + $0x50] sm:$0xff]
        %v1096 = vld [vmem:[%s9 + $0x58] sm:$0xff]
        %v1097 = vld [vmem:[%s9 + $0x60] sm:$0xff]
        %v1098 = vld [vmem:[%s9 + $0x68] sm:$0xff]
        %v1099 = vld [vmem:[%s9 + $0x70] sm:$0xff]
        %v1100 = vld [vmem:[%s9 + $0x78] sm:$0xff]
        %v1101 = vld [vmem:[#allocation3 + $0x1] sm:$0xff]
        %v1102 = vld [vmem:[#allocation3 + $0x9] sm:$0xff]
        %s1103 = scalar_lea.vmem %s9, 128
        %v1104 = vld [vmem:[%s1103] sm:$0xff]
        %v1105 = vld [vmem:[%s1103 + $0x8] sm:$0xff]
        %v1106 = vld [vmem:[%s1103 + $0x10] sm:$0xff]
        %v1107 = vld [vmem:[%s1103 + $0x18] sm:$0xff]
        %v1108 = vld [vmem:[%s1103 + $0x20] sm:$0xff]
        %v1109 = vld [vmem:[%s1103 + $0x28] sm:$0xff]
        %v1110 = vld [vmem:[%s1103 + $0x30] sm:$0xff]
        %v1111 = vld [vmem:[%s1103 + $0x38] sm:$0xff]
        %v1112 = vld [vmem:[%s1103 + $0x40] sm:$0xff]
        %v1113 = vld [vmem:[%s1103 + $0x48] sm:$0xff]
        %v1114 = vld [vmem:[%s1103 + $0x50] sm:$0xff]
        %v1115 = vld [vmem:[%s1103 + $0x58] sm:$0xff]
        %v1116 = vld [vmem:[%s1103 + $0x60] sm:$0xff]
        %v1117 = vld [vmem:[%s1103 + $0x68] sm:$0xff]
        %v1118 = vld [vmem:[%s1103 + $0x70] sm:$0xff]
        %v1119 = vld [vmem:[%s1103 + $0x78] sm:$0xff]
        %1120 = vmatprep.subr.mxu0 0.0
        %1121 = vmatpush1.msra.mxu0 %v1119
        %1122 = vmatprep.subr.mxu0 0.0
        %1123 = vmatpush1.msra.mxu0 %v1118
        %1124 = vmatprep.subr.mxu0 0.0
        %1125 = vmatpush1.msra.mxu0 %v1117
        %1126 = vmatprep.subr.mxu0 0.0
        %1127 = vmatpush1.msra.mxu0 %v1116
        %1128 = vmatprep.subr.mxu0 0.0
        %1129 = vmatpush1.msra.mxu0 %v1115
        %1130 = vmatprep.subr.mxu0 0.0
        %1131 = vmatpush1.msra.mxu0 %v1114
        %1132 = vmatprep.subr.mxu0 0.0
        %1133 = vmatpush1.msra.mxu0 %v1113
        %1134 = vmatprep.subr.mxu0 0.0
        %1135 = vmatpush1.msra.mxu0 %v1112
        %1136 = vmatprep.subr.mxu0 0.0
        %1137 = vmatpush1.msra.mxu0 %v1111
        %1138 = vmatprep.subr.mxu0 0.0
        %1139 = vmatpush1.msra.mxu0 %v1110
        %1140 = vmatprep.subr.mxu0 0.0
        %1141 = vmatpush1.msra.mxu0 %v1109
        %1142 = vmatprep.subr.mxu0 0.0
        %1143 = vmatpush1.msra.mxu0 %v1108
        %1144 = vmatprep.subr.mxu0 0.0
        %1145 = vmatpush1.msra.mxu0 %v1107
        %1146 = vmatprep.subr.mxu0 0.0
        %1147 = vmatpush1.msra.mxu0 %v1106
        %1148 = vmatprep.subr.mxu0 0.0
        %1149 = vmatpush1.msra.mxu0 %v1105
        %1150 = vmatprep.subr.mxu0 0.0
        %1151 = vmatpush1.msra.mxu0 %v1104
        %1152 = vmatprep.subr.mxu0 0.0
        %1153 = vmatpush2.msra.mxu0 0.0
        %1154 = vmatprep.subr.mxu0 0.0
        %1155 = vmatpush2.msra.mxu0 0.0
        %1156 = vmatprep.subr.mxu0 0.0
        %1157 = vmatpush2.msra.mxu0 0.0
        %1158 = vmatprep.subr.mxu0 0.0
        %1159 = vmatpush2.msra.mxu0 0.0
        %1160 = vmatprep.subr.mxu0 0.0
        %1161 = vmatpush2.msra.mxu0 0.0
        %1162 = vmatprep.subr.mxu0 0.0
        %1163 = vmatpush2.msra.mxu0 0.0
        %1164 = vmatprep.subr.mxu0 0.0
        %1165 = vmatpush2.msra.mxu0 0.0
        %1166 = vmatprep.subr.mxu0 0.0
        %1167 = vmatpush2.msra.mxu0 0.0
        %1168 = vmatprep.subr.mxu0 0.0
        %1169 = vmatpush2.msra.mxu0 0.0
        %1170 = vmatprep.subr.mxu0 0.0
        %1171 = vmatpush2.msra.mxu0 0.0
        %1172 = vmatprep.subr.mxu0 0.0
        %1173 = vmatpush2.msra.mxu0 0.0
        %1174 = vmatprep.subr.mxu0 0.0
        %1175 = vmatpush2.msra.mxu0 0.0
        %1176 = vmatprep.subr.mxu0 0.0
        %1177 = vmatpush2.msra.mxu0 0.0
        %1178 = vmatprep.subr.mxu0 0.0
        %1179 = vmatpush2.msra.mxu0 0.0
        %1180 = vmatprep.subr.mxu0 0.0
        %1181 = vmatpush2.msra.mxu0 0.0
        %1182 = vmatprep.subr.mxu0 0.0
        %1183 = vmatpush2.msra.mxu0 0.0
        %1184 = vmatprep.mubr.f32.mxu0 0.0
        %1185 = vmatmul.mubr.f32.gmra.mxu0 %v1101
        %v1186 = vpop.f32.mrf.mxu0
        %v1187 = vadd.f32 0.0, %v1186
        %v1188 = vpop.f32.mrf.mxu0
        %1189 = vmatprep.mubr.f32.mxu0 0.0
        %1190 = vmatmul.mubr.f32.gmra.mxu0 %v1102
        %v1191 = vpop.f32.mrf.mxu0
        %v1192 = vadd.f32 0.0, %v1191
        %v1193 = vpop.f32.mrf.mxu0
        %1194 = vdwg.mxu0
        %1195 = vmatprep.subr.mxu0 0.0
        %1196 = vmatpush1.msra.mxu0 %v1100
        %1197 = vmatprep.subr.mxu0 0.0
        %1198 = vmatpush1.msra.mxu0 %v1099
        %1199 = vmatprep.subr.mxu0 0.0
        %1200 = vmatpush1.msra.mxu0 %v1098
        %1201 = vmatprep.subr.mxu0 0.0
        %1202 = vmatpush1.msra.mxu0 %v1097
        %1203 = vmatprep.subr.mxu0 0.0
        %1204 = vmatpush1.msra.mxu0 %v1096
        %1205 = vmatprep.subr.mxu0 0.0
        %1206 = vmatpush1.msra.mxu0 %v1095
        %1207 = vmatprep.subr.mxu0 0.0
        %1208 = vmatpush1.msra.mxu0 %v1094
        %1209 = vmatprep.subr.mxu0 0.0
        %1210 = vmatpush1.msra.mxu0 %v1093
        %1211 = vmatprep.subr.mxu0 0.0
        %1212 = vmatpush1.msra.mxu0 %v1092
        %1213 = vmatprep.subr.mxu0 0.0
        %1214 = vmatpush1.msra.mxu0 %v1091
        %1215 = vmatprep.subr.mxu0 0.0
        %1216 = vmatpush1.msra.mxu0 %v1090
        %1217 = vmatprep.subr.mxu0 0.0
        %1218 = vmatpush1.msra.mxu0 %v1089
        %1219 = vmatprep.subr.mxu0 0.0
        %1220 = vmatpush1.msra.mxu0 %v1088
        %1221 = vmatprep.subr.mxu0 0.0
        %1222 = vmatpush1.msra.mxu0 %v1087
        %1223 = vmatprep.subr.mxu0 0.0
        %1224 = vmatpush1.msra.mxu0 %v1086
        %1225 = vmatprep.subr.mxu0 0.0
        %1226 = vmatpush1.msra.mxu0 %v1085
        %1227 = vmatprep.subr.mxu0 0.0
        %1228 = vmatpush2.msra.mxu0 0.0
        %1229 = vmatprep.subr.mxu0 0.0
        %1230 = vmatpush2.msra.mxu0 0.0
        %1231 = vmatprep.subr.mxu0 0.0
        %1232 = vmatpush2.msra.mxu0 0.0
        %1233 = vmatprep.subr.mxu0 0.0
        %1234 = vmatpush2.msra.mxu0 0.0
        %1235 = vmatprep.subr.mxu0 0.0
        %1236 = vmatpush2.msra.mxu0 0.0
        %1237 = vmatprep.subr.mxu0 0.0
        %1238 = vmatpush2.msra.mxu0 0.0
        %1239 = vmatprep.subr.mxu0 0.0
        %1240 = vmatpush2.msra.mxu0 0.0
        %1241 = vmatprep.subr.mxu0 0.0
        %1242 = vmatpush2.msra.mxu0 0.0
        %1243 = vmatprep.subr.mxu0 0.0
        %1244 = vmatpush2.msra.mxu0 0.0
        %1245 = vmatprep.subr.mxu0 0.0
        %1246 = vmatpush2.msra.mxu0 0.0
        %1247 = vmatprep.subr.mxu0 0.0
        %1248 = vmatpush2.msra.mxu0 0.0
        %1249 = vmatprep.subr.mxu0 0.0
        %1250 = vmatpush2.msra.mxu0 0.0
        %1251 = vmatprep.subr.mxu0 0.0
        %1252 = vmatpush2.msra.mxu0 0.0
        %1253 = vmatprep.subr.mxu0 0.0
        %1254 = vmatpush2.msra.mxu0 0.0
        %1255 = vmatprep.subr.mxu0 0.0
        %1256 = vmatpush2.msra.mxu0 0.0
        %1257 = vmatprep.subr.mxu0 0.0
        %1258 = vmatpush2.msra.mxu0 0.0
        %1259 = vmatprep.mubr.f32.mxu0 0.0
        %1260 = vmatmul.mubr.f32.gmra.mxu0 %v1083
        %v1261 = vpop.f32.mrf.mxu0
        %v1262 = vadd.f32 %v1187, %v1261
        %v1263 = vpop.f32.mrf.mxu0
        %1264 = vmatprep.mubr.f32.mxu0 0.0
        %1265 = vmatmul.mubr.f32.gmra.mxu0 %v1084
        %v1266 = vpop.f32.mrf.mxu0
        %v1267 = vadd.f32 %v1192, %v1266
        %v1268 = vpop.f32.mrf.mxu0
        %1269 = vdwg.mxu0
        %v1270 = vld [vmem:[#allocation3 + $0x2] sm:$0xff]
        %v1271 = vld [vmem:[#allocation3 + $0xa] sm:$0xff]
        %s1272 = scalar_lea.vmem %s9, 256
        %v1273 = vld [vmem:[%s1272] sm:$0xff]
        %v1274 = vld [vmem:[%s1272 + $0x8] sm:$0xff]
        %v1275 = vld [vmem:[%s1272 + $0x10] sm:$0xff]
        %v1276 = vld [vmem:[%s1272 + $0x18] sm:$0xff]
        %v1277 = vld [vmem:[%s1272 + $0x20] sm:$0xff]
        %v1278 = vld [vmem:[%s1272 + $0x28] sm:$0xff]
        %v1279 = vld [vmem:[%s1272 + $0x30] sm:$0xff]
        %v1280 = vld [vmem:[%s1272 + $0x38] sm:$0xff]
        %v1281 = vld [vmem:[%s1272 + $0x40] sm:$0xff]
        %v1282 = vld [vmem:[%s1272 + $0x48] sm:$0xff]
        %v1283 = vld [vmem:[%s1272 + $0x50] sm:$0xff]
        %v1284 = vld [vmem:[%s1272 + $0x58] sm:$0xff]
        %v1285 = vld [vmem:[%s1272 + $0x60] sm:$0xff]
        %v1286 = vld [vmem:[%s1272 + $0x68] sm:$0xff]
        %v1287 = vld [vmem:[%s1272 + $0x70] sm:$0xff]
        %v1288 = vld [vmem:[%s1272 + $0x78] sm:$0xff]
        %1289 = vmatprep.subr.mxu0 0.0
        %1290 = vmatpush1.msra.mxu0 %v1288
        %1291 = vmatprep.subr.mxu0 0.0
        %1292 = vmatpush1.msra.mxu0 %v1287
        %1293 = vmatprep.subr.mxu0 0.0
        %1294 = vmatpush1.msra.mxu0 %v1286
        %1295 = vmatprep.subr.mxu0 0.0
        %1296 = vmatpush1.msra.mxu0 %v1285
        %1297 = vmatprep.subr.mxu0 0.0
        %1298 = vmatpush1.msra.mxu0 %v1284
        %1299 = vmatprep.subr.mxu0 0.0
        %1300 = vmatpush1.msra.mxu0 %v1283
        %1301 = vmatprep.subr.mxu0 0.0
        %1302 = vmatpush1.msra.mxu0 %v1282
        %1303 = vmatprep.subr.mxu0 0.0
        %1304 = vmatpush1.msra.mxu0 %v1281
        %1305 = vmatprep.subr.mxu0 0.0
        %1306 = vmatpush1.msra.mxu0 %v1280
        %1307 = vmatprep.subr.mxu0 0.0
        %1308 = vmatpush1.msra.mxu0 %v1279
        %1309 = vmatprep.subr.mxu0 0.0
        %1310 = vmatpush1.msra.mxu0 %v1278
        %1311 = vmatprep.subr.mxu0 0.0
        %1312 = vmatpush1.msra.mxu0 %v1277
        %1313 = vmatprep.subr.mxu0 0.0
        %1314 = vmatpush1.msra.mxu0 %v1276
        %1315 = vmatprep.subr.mxu0 0.0
        %1316 = vmatpush1.msra.mxu0 %v1275
        %1317 = vmatprep.subr.mxu0 0.0
        %1318 = vmatpush1.msra.mxu0 %v1274
        %1319 = vmatprep.subr.mxu0 0.0
        %1320 = vmatpush1.msra.mxu0 %v1273
        %1321 = vmatprep.subr.mxu0 0.0
        %1322 = vmatpush2.msra.mxu0 0.0
        %1323 = vmatprep.subr.mxu0 0.0
        %1324 = vmatpush2.msra.mxu0 0.0
        %1325 = vmatprep.subr.mxu0 0.0
        %1326 = vmatpush2.msra.mxu0 0.0
        %1327 = vmatprep.subr.mxu0 0.0
        %1328 = vmatpush2.msra.mxu0 0.0
        %1329 = vmatprep.subr.mxu0 0.0
        %1330 = vmatpush2.msra.mxu0 0.0
        %1331 = vmatprep.subr.mxu0 0.0
        %1332 = vmatpush2.msra.mxu0 0.0
        %1333 = vmatprep.subr.mxu0 0.0
        %1334 = vmatpush2.msra.mxu0 0.0
        %1335 = vmatprep.subr.mxu0 0.0
        %1336 = vmatpush2.msra.mxu0 0.0
        %1337 = vmatprep.subr.mxu0 0.0
        %1338 = vmatpush2.msra.mxu0 0.0
        %1339 = vmatprep.subr.mxu0 0.0
        %1340 = vmatpush2.msra.mxu0 0.0
        %1341 = vmatprep.subr.mxu0 0.0
        %1342 = vmatpush2.msra.mxu0 0.0
        %1343 = vmatprep.subr.mxu0 0.0
        %1344 = vmatpush2.msra.mxu0 0.0
        %1345 = vmatprep.subr.mxu0 0.0
        %1346 = vmatpush2.msra.mxu0 0.0
        %1347 = vmatprep.subr.mxu0 0.0
        %1348 = vmatpush2.msra.mxu0 0.0
        %1349 = vmatprep.subr.mxu0 0.0
        %1350 = vmatpush2.msra.mxu0 0.0
        %1351 = vmatprep.subr.mxu0 0.0
        %1352 = vmatpush2.msra.mxu0 0.0
        %1353 = vmatprep.mubr.f32.mxu0 0.0
        %1354 = vmatmul.mubr.f32.gmra.mxu0 %v1270
        %v1355 = vpop.f32.mrf.mxu0
        %v1356 = vadd.f32 0.0, %v1355
        %v1357 = vpop.f32.mrf.mxu0
        %1358 = vmatprep.mubr.f32.mxu0 0.0
        %1359 = vmatmul.mubr.f32.gmra.mxu0 %v1271
        %v1360 = vpop.f32.mrf.mxu0
        %v1361 = vadd.f32 0.0, %v1360
        %v1362 = vpop.f32.mrf.mxu0
        %1363 = vdwg.mxu0
        %v1364 = vadd.f32 %v1262, %v1356
        %v1365 = vadd.f32 %v1267, %v1361
        %v1366 = vld [vmem:[%s10] sm:$0x1]
        %v1368 = vlaneseq
        %v1369 = vshrl.u32 %v1368, 7
        %v1370 = vsub.s32 0, %v1369
        %v1371 = vrot.slane %v1366, %v1370
        %v1373 = vadd.f32 %v1364, %v1371
        %v1374 = vadd.f32 %v1365, %v1371
        %1375 = vst.msk [vmem:[%s433] sm:$0xff] %vm782, %v1373
        %1376 = vst.msk [vmem:[%s433 + $0x8] sm:$0xff] %vm782, %v1374
        %s1377 = sand.u32 %s276, 1
        %s1378 = scalar_lea.sflag [#allocation5], %s1377
        %s1379 = sand.u32 %s276, 1
        %s1380 = smul.addr %s1379, 16
        %s1381 = scalar_lea.vmem [#allocation10], %s1380
        // Predicated region
        $region77: #{tpu_custom_call.1} parent=63 // pred_check
          %p1382 = pneg %p286
        $region78: #{tpu_custom_call.1} parent=63 // pred_check_branch
          %1384 = sbr.rel (%p1382) target = $region80
        $region79: #{tpu_custom_call.1} parent=63 // pred_region
          %s1386 = ssub.s32 256, 256
          %1387 = vsyncadd %s1378, %s1386
          %s1388 = smul.addr %s27, 2
          %s1389 = smul.addr %s1388, 128
          %s1390 = scalar_lea.hbm %s11, %s1389
          %s1391 = sshll.u32 %s1381, 4
          %s1392 = int_to_ptr.vmem [resolvable:$true] %s1391
          %1397 = dma.vmem_to_hbm [thread:$0]  %s1392, 256, %s1390, %s1378, 128, 128, 8
        $region80: #{tpu_custom_call.1} parent=63 // pred_fallthru
          _
      $region64: #{tpu_custom_call.1} parent=5 // pred_fallthru
        _
      %p1398 = scmp.le.s32.totalorder 2, %s22
      // Predicated region
      $region81: #{tpu_custom_call.1} parent=5 // pred_check
        %p1399 = pneg %p1398
      $region82: #{tpu_custom_call.1} parent=5 // pred_check_branch
        %1401 = sbr.rel (%p1399) target = $region84
      $region83: #{tpu_custom_call.1} parent=5 // pred_region
        %s1402 = ssub.s32 %s22, 2
        // Predicated region
        $region85: #{tpu_custom_call.1} parent=83 // pred_check
          %p1403 = pneg %p292
        $region86: #{tpu_custom_call.1} parent=83 // pred_check_branch
          %1405 = sbr.rel (%p1403) target = $region88
        $region87: #{tpu_custom_call.1} parent=83 // pred_region
          %s1406 = sand.u32 %s277, 1
          %s1407 = scalar_lea.sflag [#allocation5], %s1406
          %s1408 = sand.u32 %s277, 1
          %s1409 = smul.addr %s1408, 16
          %s1410 = scalar_lea.vmem [#allocation10], %s1409
          %1411 = dma.done %s1407, 256
        $region88: #{tpu_custom_call.1} parent=83 // pred_fallthru
          _
      $region84: #{tpu_custom_call.1} parent=5 // pred_fallthru
        _
    $region6: #{tpu_custom_call.1} parent=1 // loop_footer
      %s26 = sadd.s32 1, %s22
    $region7: #{tpu_custom_call.1} parent=1 // loop_footer_branch
      %21 = sbr.rel target = $region3
    $region8: #{tpu_custom_call.1} parent=1 // loop_exit
      _
    %1412 = vsyncpa [#allocation5], 1
    %s1413 = scalar_lea.sflag [#allocation5], 1
    %1414 = vsyncpa %s1413, 1
    %1415 = vsyncpa [#allocation6], 1
    %s1416 = scalar_lea.sflag [#allocation6], 1
    %1417 = vsyncpa %s1416, 1
    %1418 = vsyncpa [#allocation8], 1

</llo_original>
